<compile_context>
chip_gen: v6e
topology: v6e:2x2x1
jax: 0.10.0
libtpu: 0.0.40
codegen_flags: <defaults>
</compile_context>

<pallas_src>
import functools

import jax
import jax.numpy as jnp
from jax import lax
from jax.experimental import pallas as pl
from jax.experimental.pallas import tpu as pltpu


def _gru_chunk_kernel(gi_ref, whhT_ref, bhn_ref, out_ref, h_scr, *, chunk):
    """Recurrent part of one GRU layer over a chunk of timesteps.

    gi_ref  : (chunk, 3, B, H)  precomputed input projection per gate [r, z, n]
                                with b_ih (all gates) + b_hh (r, z) folded in.
    whhT_ref: (3, H, H)         pre-transposed recurrent weights (H_in, H_out).
    bhn_ref : (1, H)            b_hh of the n-gate (must stay inside r * (...)).
    out_ref : (chunk, B, H)     r_out for this chunk.
    h_scr   : (B, H) f32 VMEM   hidden state carried across grid steps.
    """
    # PyTorch default h0 = zeros, set on the first chunk only.
    @pl.when(pl.program_id(0) == 0)
    def _():
        h_scr[...] = jnp.zeros_like(h_scr)

    # Loaded once per chunk (hoisted out of the per-timestep loop).
    w_r = whhT_ref[0]          # (H, H)
    w_z = whhT_ref[1]
    w_n = whhT_ref[2]
    b_hn = bhn_ref[...]        # (1, H)

    def step(s, carry):
        g = gi_ref[s]                          # (3, B, H)
        h_prev = h_scr[...]                    # (B, H), f32
        h_c = h_prev.astype(w_r.dtype)         # MXU operand dtype
        gh_r = jnp.dot(h_c, w_r, preferred_element_type=jnp.float32)
        gh_z = jnp.dot(h_c, w_z, preferred_element_type=jnp.float32)
        gh_n = jnp.dot(h_c, w_n, preferred_element_type=jnp.float32) + b_hn
        r = jax.nn.sigmoid(g[0] + gh_r)
        z = jax.nn.sigmoid(g[1] + gh_z)
        n = jnp.tanh(g[2] + r * gh_n)
        h_new = (1.0 - z) * n + z * h_prev
        h_scr[...] = h_new
        out_ref[s] = h_new.astype(out_ref.dtype)
        return carry

    lax.fori_loop(0, chunk, step, 0, unroll=True)


def _pick_chunk(T, target=16):
    c = min(T, target)
    while T % c != 0:
        c -= 1
    return c


def gru_layer_pallas(x, w_ih, w_hh, b_ih, b_hh, *, chunk=None,
                     compute_dtype=jnp.float32):
    """One GRU layer. x: (T, B, I) -> (r_out (T, B, H), h_last (B, H))."""
    T, B, I = x.shape
    H = w_hh.shape[1]
    if chunk is None:
        chunk = _pick_chunk(T)

    # ---- Hoisted input projection: one large MXU-friendly matmul over all
    #      timesteps.  Fold b_ih (all gates) and b_hh (r, z gates) here; the
    #      n-gate b_hh must stay inside the kernel (it sits inside r * (...)).
    w_ih_g = w_ih.reshape(3, H, I)                                    # [g, out, in]
    gate_mask = jnp.array([1.0, 1.0, 0.0], b_hh.dtype)[:, None]
    bias = b_ih.reshape(3, H) + gate_mask * b_hh.reshape(3, H)        # (3, H)
    gi = (jnp.einsum("tbi,ghi->tgbh", x.astype(jnp.float32), w_ih_g)
          + bias[None, :, None, :]).astype(jnp.float32)               # (T, 3, B, H)

    # ---- Pre-transposed, gate-split recurrent weights (H_in, H_out) per gate:
    #      no per-step transpose in the kernel, lane-aligned per-gate outputs.
    whhT = jnp.swapaxes(w_hh.reshape(3, H, H), 1, 2).astype(compute_dtype)
    b_hn = b_hh.reshape(3, H)[2].reshape(1, H).astype(jnp.float32)

    grid_spec = pltpu.PrefetchScalarGridSpec(
        num_scalar_prefetch=0,
        grid=(T // chunk,),
        in_specs=[
            # Time-chunked input projection: dense DMAs, amortized grid overhead.
            pl.BlockSpec((chunk, 3, B, H), lambda i: (i, 0, 0, 0)),
            # Constant-index operands, resident across the whole grid.
            # TODO(synk): for large H, add pipeline_mode=pl.Buffered(1) here and
            # use bf16 weights (v6e/v7x) to avoid double-buffering 3*H*H in VMEM.
            pl.BlockSpec((3, H, H), lambda i: (0, 0, 0)),
            pl.BlockSpec((1, H), lambda i: (0, 0)),
        ],
        out_specs=pl.BlockSpec((chunk, B, H), lambda i: (i, 0, 0)),
        scratch_shapes=[pltpu.VMEM((B, H), jnp.float32)],
    )

    r_out = pl.pallas_call(
        functools.partial(_gru_chunk_kernel, chunk=chunk),
        out_shape=jax.ShapeDtypeStruct((T, B, H), jnp.float32),
        grid_spec=grid_spec,
        compiler_params=pltpu.CompilerParams(
            dimension_semantics=("arbitrary",)),   # time chunks are sequential
    )(gi, whhT, b_hn)

    # h_n is just the last output timestep; no extra resident output buffer.
    return r_out, r_out[-1]


def init_gru_params(key, input_size, hidden_size, num_layers):
    params = []
    scale = 1.0 / jnp.sqrt(hidden_size)
    for layer in range(num_layers):
        in_sz = input_size if layer == 0 else hidden_size
        key, k1, k2, k3, k4 = jax.random.split(key, 5)
        params.append(dict(
            w_ih=jax.random.uniform(k1, (3 * hidden_size, in_sz),
                                    jnp.float32, -scale, scale),
            w_hh=jax.random.uniform(k2, (3 * hidden_size, hidden_size),
                                    jnp.float32, -scale, scale),
            b_ih=jax.random.uniform(k3, (3 * hidden_size,),
                                    jnp.float32, -scale, scale),
            b_hh=jax.random.uniform(k4, (3 * hidden_size,),
                                    jnp.float32, -scale, scale),
        ))
    return params


def encoder_rnn_forward(x, params):
    """Pallas implementation of Encoder_RNN.forward: returns (r_out, h_n)."""
    h_ns = []
    layer_in = x
    for p in params:
        layer_in, h_last = gru_layer_pallas(
            layer_in, p["w_ih"], p["w_hh"], p["b_ih"], p["b_hh"])
        h_ns.append(h_last)
    return layer_in, jnp.stack(h_ns, axis=0)


def encoder_rnn_reference(x, params):
    """Pure-JAX reference (lax.scan GRU) for correctness checking."""
    h_ns = []
    layer_in = x
    for p in params:
        H = p["w_hh"].shape[1]

        def step(h, x_t, p=p, H=H):
            gi = x_t @ p["w_ih"].T + p["b_ih"]
            gh = h @ p["w_hh"].T + p["b_hh"]
            r = jax.nn.sigmoid(gi[:, :H] + gh[:, :H])
            z = jax.nn.sigmoid(gi[:, H:2 * H] + gh[:, H:2 * H])
            n = jnp.tanh(gi[:, 2 * H:] + r * gh[:, 2 * H:])
            h_new = (1.0 - z) * n + z * h
            return h_new, h_new

        h0 = jnp.zeros((x.shape[1], H), jnp.float32)
        h_last, outs = lax.scan(step, h0, layer_in)
        layer_in = outs
        h_ns.append(h_last)
    return layer_in, jnp.stack(h_ns, axis=0)


if __name__ == "__main__":
    seq_len, batch, input_size, hidden_size, num_layers = 8, 2, 16, 32, 2

    key = jax.random.PRNGKey(0)
    kx, kp = jax.random.split(key)
    x = jax.random.normal(kx, (seq_len, batch, input_size), jnp.float32)
    params = init_gru_params(kp, input_size, hidden_size, num_layers)

    fwd = jax.jit(encoder_rnn_forward)
    r_out, h_n = fwd(x, params)
    jax.block_until_ready((r_out, h_n))

    r_ref, h_ref = encoder_rnn_reference(x, params)
    assert r_out.shape == (seq_len, batch, hidden_size)
    assert h_n.shape == (num_layers, batch, hidden_size)
    assert jnp.allclose(r_out, r_ref, atol=1e-3, rtol=1e-3)
    assert jnp.allclose(h_n, h_ref, atol=1e-3, rtol=1e-3)

    print("KERNEL_OK")
</pallas_src>

<mosaic_0001>
module attributes {stable_mosaic.version = 11 : i64} {
  func.func @_gru_chunk_kernel(%arg0: i32, %arg1: memref<8x3x2x32xf32, #tpu.memory_space<vmem>>, %arg2: memref<3x32x32xf32, #tpu.memory_space<vmem>>, %arg3: memref<1x32xf32, #tpu.memory_space<vmem>>, %arg4: memref<8x2x32xf32, #tpu.memory_space<vmem>>, %arg5: memref<2x32xf32, #tpu.memory_space<vmem>>) attributes {dimension_semantics = [#tpu.dimension_semantics<arbitrary>], iteration_bounds = array<i64: 1>, scalar_prefetch = 0 : i64, scratch_operands = 1 : i64, tpu.core_type = #tpu.core_type<tc>, window_params = [{transform_indices = @transform_0, window_bounds = array<i64: 8, 3, 2, 32>}, {pipeline_mode = #tpu.pipeline_mode<synchronous>, transform_indices = @transform_1, window_bounds = array<i64: 3, 32, 32>}, {pipeline_mode = #tpu.pipeline_mode<synchronous>, transform_indices = @transform_2, window_bounds = array<i64: 1, 32>}, {transform_indices = @transform_3, window_bounds = array<i64: 8, 2, 32>}]} {
    %c0_i32 = arith.constant 0 : i32
    %0 = arith.cmpi eq, %arg0, %c0_i32 : i32
    %1 = arith.extui %0 : i1 to i32
    %c0_i32_0 = arith.constant 0 : i32
    %2 = arith.cmpi ne, %1, %c0_i32_0 : i32
    scf.if %2 {
      %cst_129 = arith.constant 0.000000e+00 : f32
      %330 = vector.broadcast %cst_129 : f32 to vector<2x32xf32>
      %c0_130 = arith.constant 0 : index
      %c0_131 = arith.constant 0 : index
      %331 = vector.load %arg5[%c0_130, %c0_131] : memref<2x32xf32, #tpu.memory_space<vmem>>, vector<2x32xf32>
      tpu.vector_store %arg5[%c0_130, %c0_131], %330 {strides = array<i32>} : memref<2x32xf32, #tpu.memory_space<vmem>>, vector<2x32xf32>,
    } else {
    }
    %c0 = arith.constant 0 : index
    %c0_1 = arith.constant 0 : index
    %c0_2 = arith.constant 0 : index
    %3 = vector.load %arg2[%c0, %c0_1, %c0_2] : memref<3x32x32xf32, #tpu.memory_space<vmem>>, vector<1x32x32xf32>
    %4 = vector.shape_cast %3 : vector<1x32x32xf32> to vector<32x32xf32>
    %c1 = arith.constant 1 : index
    %c0_3 = arith.constant 0 : index
    %c0_4 = arith.constant 0 : index
    %5 = vector.load %arg2[%c1, %c0_3, %c0_4] : memref<3x32x32xf32, #tpu.memory_space<vmem>>, vector<1x32x32xf32>
    %6 = vector.shape_cast %5 : vector<1x32x32xf32> to vector<32x32xf32>
    %c2 = arith.constant 2 : index
    %c0_5 = arith.constant 0 : index
    %c0_6 = arith.constant 0 : index
    %7 = vector.load %arg2[%c2, %c0_5, %c0_6] : memref<3x32x32xf32, #tpu.memory_space<vmem>>, vector<1x32x32xf32>
    %8 = vector.shape_cast %7 : vector<1x32x32xf32> to vector<32x32xf32>
    %c0_7 = arith.constant 0 : index
    %c0_8 = arith.constant 0 : index
    %9 = vector.load %arg3[%c0_7, %c0_8] : memref<1x32xf32, #tpu.memory_space<vmem>>, vector<1x32xf32>
    %c0_i32_9 = arith.constant 0 : i32
    %10 = arith.index_cast %c0_i32_9 : i32 to index
    %c0_10 = arith.constant 0 : index
    %c0_11 = arith.constant 0 : index
    %c0_12 = arith.constant 0 : index
    %11 = vector.load %arg1[%10, %c0_10, %c0_11, %c0_12] : memref<8x3x2x32xf32, #tpu.memory_space<vmem>>, vector<1x3x2x32xf32>
    %12 = vector.shape_cast %11 : vector<1x3x2x32xf32> to vector<3x2x32xf32>
    %c0_13 = arith.constant 0 : index
    %c0_14 = arith.constant 0 : index
    %13 = vector.load %arg5[%c0_13, %c0_14] : memref<2x32xf32, #tpu.memory_space<vmem>>, vector<2x32xf32>
    %cst = arith.constant dense<0.000000e+00> : vector<2x32xf32>
    %14 = tpu.matmul %13, %4, %cst {dimension_numbers = #tpu.dot_dimension_numbers<[1], [0], [0], [1], [0, 0, 1, 1], [], []>} : vector<2x32xf32>, vector<32x32xf32>, vector<2x32xf32> -> vector<2x32xf32>
    %cst_15 = arith.constant dense<0.000000e+00> : vector<2x32xf32>
    %15 = tpu.matmul %13, %6, %cst_15 {dimension_numbers = #tpu.dot_dimension_numbers<[1], [0], [0], [1], [0, 0, 1, 1], [], []>} : vector<2x32xf32>, vector<32x32xf32>, vector<2x32xf32> -> vector<2x32xf32>
    %cst_16 = arith.constant dense<0.000000e+00> : vector<2x32xf32>
    %16 = tpu.matmul %13, %8, %cst_16 {dimension_numbers = #tpu.dot_dimension_numbers<[1], [0], [0], [1], [0, 0, 1, 1], [], []>} : vector<2x32xf32>, vector<32x32xf32>, vector<2x32xf32> -> vector<2x32xf32>
    %17 = vector.broadcast %9 : vector<1x32xf32> to vector<2x32xf32>
    %18 = arith.addf %16, %17 : vector<2x32xf32>
    %19 = vector.extract_strided_slice %12 {offsets = [0, 0, 0], sizes = [1, 2, 32], strides = [1, 1, 1]} : vector<3x2x32xf32> to vector<1x2x32xf32>
    %20 = vector.shape_cast %19 : vector<1x2x32xf32> to vector<2x32xf32>
    %21 = arith.addf %20, %14 : vector<2x32xf32>
    %22 = arith.negf %21 : vector<2x32xf32>
    %23 = math.exp %22 : vector<2x32xf32>
    %cst_17 = arith.constant 1.000000e+00 : f32
    %24 = vector.broadcast %cst_17 : f32 to vector<2x32xf32>
    %25 = arith.addf %24, %23 : vector<2x32xf32>
    %26 = arith.divf %24, %25 : vector<2x32xf32>
    %27 = vector.extract_strided_slice %12 {offsets = [1, 0, 0], sizes = [1, 2, 32], strides = [1, 1, 1]} : vector<3x2x32xf32> to vector<1x2x32xf32>
    %28 = vector.shape_cast %27 : vector<1x2x32xf32> to vector<2x32xf32>
    %29 = arith.addf %28, %15 : vector<2x32xf32>
    %30 = arith.negf %29 : vector<2x32xf32>
    %31 = math.exp %30 : vector<2x32xf32>
    %cst_18 = arith.constant 1.000000e+00 : f32
    %32 = vector.broadcast %cst_18 : f32 to vector<2x32xf32>
    %33 = arith.addf %32, %31 : vector<2x32xf32>
    %34 = arith.divf %32, %33 : vector<2x32xf32>
    %35 = vector.extract_strided_slice %12 {offsets = [2, 0, 0], sizes = [1, 2, 32], strides = [1, 1, 1]} : vector<3x2x32xf32> to vector<1x2x32xf32>
    %36 = vector.shape_cast %35 : vector<1x2x32xf32> to vector<2x32xf32>
    %37 = arith.mulf %26, %18 : vector<2x32xf32>
    %38 = arith.addf %36, %37 : vector<2x32xf32>
    %39 = math.tanh %38 : vector<2x32xf32>
    %cst_19 = arith.constant 1.000000e+00 : f32
    %40 = vector.broadcast %cst_19 : f32 to vector<2x32xf32>
    %41 = arith.subf %40, %34 : vector<2x32xf32>
    %42 = arith.mulf %41, %39 : vector<2x32xf32>
    %43 = arith.mulf %34, %13 : vector<2x32xf32>
    %44 = arith.addf %42, %43 : vector<2x32xf32>
    %c0_20 = arith.constant 0 : index
    %c0_21 = arith.constant 0 : index
    %45 = vector.load %arg5[%c0_20, %c0_21] : memref<2x32xf32, #tpu.memory_space<vmem>>, vector<2x32xf32>
    tpu.vector_store %arg5[%c0_20, %c0_21], %44 {strides = array<i32>} : memref<2x32xf32, #tpu.memory_space<vmem>>, vector<2x32xf32>,
    %46 = arith.index_cast %c0_i32_9 : i32 to index
    %c0_22 = arith.constant 0 : index
    %c0_23 = arith.constant 0 : index
    %47 = vector.load %arg4[%46, %c0_22, %c0_23] : memref<8x2x32xf32, #tpu.memory_space<vmem>>, vector<1x2x32xf32>
    %48 = vector.shape_cast %47 : vector<1x2x32xf32> to vector<2x32xf32>
    %49 = vector.shape_cast %44 : vector<2x32xf32> to vector<1x2x32xf32>
    tpu.vector_store %arg4[%46, %c0_22, %c0_23], %49 {strides = array<i32>} : memref<8x2x32xf32, #tpu.memory_space<vmem>>, vector<1x2x32xf32>,
    %c1_i32 = arith.constant 1 : i32
    %50 = arith.index_cast %c1_i32 : i32 to index
    %c0_24 = arith.constant 0 : index
    %c0_25 = arith.constant 0 : index
    %c0_26 = arith.constant 0 : index
    %51 = vector.load %arg1[%50, %c0_24, %c0_25, %c0_26] : memref<8x3x2x32xf32, #tpu.memory_space<vmem>>, vector<1x3x2x32xf32>
    %52 = vector.shape_cast %51 : vector<1x3x2x32xf32> to vector<3x2x32xf32>
    %c0_27 = arith.constant 0 : index
    %c0_28 = arith.constant 0 : index
    %53 = vector.load %arg5[%c0_27, %c0_28] : memref<2x32xf32, #tpu.memory_space<vmem>>, vector<2x32xf32>
    %cst_29 = arith.constant dense<0.000000e+00> : vector<2x32xf32>
    %54 = tpu.matmul %53, %4, %cst_29 {dimension_numbers = #tpu.dot_dimension_numbers<[1], [0], [0], [1], [0, 0, 1, 1], [], []>} : vector<2x32xf32>, vector<32x32xf32>, vector<2x32xf32> -> vector<2x32xf32>
    %cst_30 = arith.constant dense<0.000000e+00> : vector<2x32xf32>
    %55 = tpu.matmul %53, %6, %cst_30 {dimension_numbers = #tpu.dot_dimension_numbers<[1], [0], [0], [1], [0, 0, 1, 1], [], []>} : vector<2x32xf32>, vector<32x32xf32>, vector<2x32xf32> -> vector<2x32xf32>
    %cst_31 = arith.constant dense<0.000000e+00> : vector<2x32xf32>
    %56 = tpu.matmul %53, %8, %cst_31 {dimension_numbers = #tpu.dot_dimension_numbers<[1], [0], [0], [1], [0, 0, 1, 1], [], []>} : vector<2x32xf32>, vector<32x32xf32>, vector<2x32xf32> -> vector<2x32xf32>
    %57 = vector.broadcast %9 : vector<1x32xf32> to vector<2x32xf32>
    %58 = arith.addf %56, %57 : vector<2x32xf32>
    %59 = vector.extract_strided_slice %52 {offsets = [0, 0, 0], sizes = [1, 2, 32], strides = [1, 1, 1]} : vector<3x2x32xf32> to vector<1x2x32xf32>
    %60 = vector.shape_cast %59 : vector<1x2x32xf32> to vector<2x32xf32>
    %61 = arith.addf %60, %54 : vector<2x32xf32>
    %62 = arith.negf %61 : vector<2x32xf32>
    %63 = math.exp %62 : vector<2x32xf32>
    %cst_32 = arith.constant 1.000000e+00 : f32
    %64 = vector.broadcast %cst_32 : f32 to vector<2x32xf32>
    %65 = arith.addf %64, %63 : vector<2x32xf32>
    %66 = arith.divf %64, %65 : vector<2x32xf32>
    %67 = vector.extract_strided_slice %52 {offsets = [1, 0, 0], sizes = [1, 2, 32], strides = [1, 1, 1]} : vector<3x2x32xf32> to vector<1x2x32xf32>
    %68 = vector.shape_cast %67 : vector<1x2x32xf32> to vector<2x32xf32>
    %69 = arith.addf %68, %55 : vector<2x32xf32>
    %70 = arith.negf %69 : vector<2x32xf32>
    %71 = math.exp %70 : vector<2x32xf32>
    %cst_33 = arith.constant 1.000000e+00 : f32
    %72 = vector.broadcast %cst_33 : f32 to vector<2x32xf32>
    %73 = arith.addf %72, %71 : vector<2x32xf32>
    %74 = arith.divf %72, %73 : vector<2x32xf32>
    %75 = vector.extract_strided_slice %52 {offsets = [2, 0, 0], sizes = [1, 2, 32], strides = [1, 1, 1]} : vector<3x2x32xf32> to vector<1x2x32xf32>
    %76 = vector.shape_cast %75 : vector<1x2x32xf32> to vector<2x32xf32>
    %77 = arith.mulf %66, %58 : vector<2x32xf32>
    %78 = arith.addf %76, %77 : vector<2x32xf32>
    %79 = math.tanh %78 : vector<2x32xf32>
    %cst_34 = arith.constant 1.000000e+00 : f32
    %80 = vector.broadcast %cst_34 : f32 to vector<2x32xf32>
    %81 = arith.subf %80, %74 : vector<2x32xf32>
    %82 = arith.mulf %81, %79 : vector<2x32xf32>
    %83 = arith.mulf %74, %53 : vector<2x32xf32>
    %84 = arith.addf %82, %83 : vector<2x32xf32>
    %c0_35 = arith.constant 0 : index
    %c0_36 = arith.constant 0 : index
    %85 = vector.load %arg5[%c0_35, %c0_36] : memref<2x32xf32, #tpu.memory_space<vmem>>, vector<2x32xf32>
    tpu.vector_store %arg5[%c0_35, %c0_36], %84 {strides = array<i32>} : memref<2x32xf32, #tpu.memory_space<vmem>>, vector<2x32xf32>,
    %86 = arith.index_cast %c1_i32 : i32 to index
    %c0_37 = arith.constant 0 : index
    %c0_38 = arith.constant 0 : index
    %87 = vector.load %arg4[%86, %c0_37, %c0_38] : memref<8x2x32xf32, #tpu.memory_space<vmem>>, vector<1x2x32xf32>
    %88 = vector.shape_cast %87 : vector<1x2x32xf32> to vector<2x32xf32>
    %89 = vector.shape_cast %84 : vector<2x32xf32> to vector<1x2x32xf32>
    tpu.vector_store %arg4[%86, %c0_37, %c0_38], %89 {strides = array<i32>} : memref<8x2x32xf32, #tpu.memory_space<vmem>>, vector<1x2x32xf32>,
    %c2_i32 = arith.constant 2 : i32
    %90 = arith.index_cast %c2_i32 : i32 to index
    %c0_39 = arith.constant 0 : index
    %c0_40 = arith.constant 0 : index
    %c0_41 = arith.constant 0 : index
    %91 = vector.load %arg1[%90, %c0_39, %c0_40, %c0_41] : memref<8x3x2x32xf32, #tpu.memory_space<vmem>>, vector<1x3x2x32xf32>
    %92 = vector.shape_cast %91 : vector<1x3x2x32xf32> to vector<3x2x32xf32>
    %c0_42 = arith.constant 0 : index
    %c0_43 = arith.constant 0 : index
    %93 = vector.load %arg5[%c0_42, %c0_43] : memref<2x32xf32, #tpu.memory_space<vmem>>, vector<2x32xf32>
    %cst_44 = arith.constant dense<0.000000e+00> : vector<2x32xf32>
    %94 = tpu.matmul %93, %4, %cst_44 {dimension_numbers = #tpu.dot_dimension_numbers<[1], [0], [0], [1], [0, 0, 1, 1], [], []>} : vector<2x32xf32>, vector<32x32xf32>, vector<2x32xf32> -> vector<2x32xf32>
    %cst_45 = arith.constant dense<0.000000e+00> : vector<2x32xf32>
    %95 = tpu.matmul %93, %6, %cst_45 {dimension_numbers = #tpu.dot_dimension_numbers<[1], [0], [0], [1], [0, 0, 1, 1], [], []>} : vector<2x32xf32>, vector<32x32xf32>, vector<2x32xf32> -> vector<2x32xf32>
    %cst_46 = arith.constant dense<0.000000e+00> : vector<2x32xf32>
    %96 = tpu.matmul %93, %8, %cst_46 {dimension_numbers = #tpu.dot_dimension_numbers<[1], [0], [0], [1], [0, 0, 1, 1], [], []>} : vector<2x32xf32>, vector<32x32xf32>, vector<2x32xf32> -> vector<2x32xf32>
    %97 = vector.broadcast %9 : vector<1x32xf32> to vector<2x32xf32>
    %98 = arith.addf %96, %97 : vector<2x32xf32>
    %99 = vector.extract_strided_slice %92 {offsets = [0, 0, 0], sizes = [1, 2, 32], strides = [1, 1, 1]} : vector<3x2x32xf32> to vector<1x2x32xf32>
    %100 = vector.shape_cast %99 : vector<1x2x32xf32> to vector<2x32xf32>
    %101 = arith.addf %100, %94 : vector<2x32xf32>
    %102 = arith.negf %101 : vector<2x32xf32>
    %103 = math.exp %102 : vector<2x32xf32>
    %cst_47 = arith.constant 1.000000e+00 : f32
    %104 = vector.broadcast %cst_47 : f32 to vector<2x32xf32>
    %105 = arith.addf %104, %103 : vector<2x32xf32>
    %106 = arith.divf %104, %105 : vector<2x32xf32>
    %107 = vector.extract_strided_slice %92 {offsets = [1, 0, 0], sizes = [1, 2, 32], strides = [1, 1, 1]} : vector<3x2x32xf32> to vector<1x2x32xf32>
    %108 = vector.shape_cast %107 : vector<1x2x32xf32> to vector<2x32xf32>
    %109 = arith.addf %108, %95 : vector<2x32xf32>
    %110 = arith.negf %109 : vector<2x32xf32>
    %111 = math.exp %110 : vector<2x32xf32>
    %cst_48 = arith.constant 1.000000e+00 : f32
    %112 = vector.broadcast %cst_48 : f32 to vector<2x32xf32>
    %113 = arith.addf %112, %111 : vector<2x32xf32>
    %114 = arith.divf %112, %113 : vector<2x32xf32>
    %115 = vector.extract_strided_slice %92 {offsets = [2, 0, 0], sizes = [1, 2, 32], strides = [1, 1, 1]} : vector<3x2x32xf32> to vector<1x2x32xf32>
    %116 = vector.shape_cast %115 : vector<1x2x32xf32> to vector<2x32xf32>
    %117 = arith.mulf %106, %98 : vector<2x32xf32>
    %118 = arith.addf %116, %117 : vector<2x32xf32>
    %119 = math.tanh %118 : vector<2x32xf32>
    %cst_49 = arith.constant 1.000000e+00 : f32
    %120 = vector.broadcast %cst_49 : f32 to vector<2x32xf32>
    %121 = arith.subf %120, %114 : vector<2x32xf32>
    %122 = arith.mulf %121, %119 : vector<2x32xf32>
    %123 = arith.mulf %114, %93 : vector<2x32xf32>
    %124 = arith.addf %122, %123 : vector<2x32xf32>
    %c0_50 = arith.constant 0 : index
    %c0_51 = arith.constant 0 : index
    %125 = vector.load %arg5[%c0_50, %c0_51] : memref<2x32xf32, #tpu.memory_space<vmem>>, vector<2x32xf32>
    tpu.vector_store %arg5[%c0_50, %c0_51], %124 {strides = array<i32>} : memref<2x32xf32, #tpu.memory_space<vmem>>, vector<2x32xf32>,
    %126 = arith.index_cast %c2_i32 : i32 to index
    %c0_52 = arith.constant 0 : index
    %c0_53 = arith.constant 0 : index
    %127 = vector.load %arg4[%126, %c0_52, %c0_53] : memref<8x2x32xf32, #tpu.memory_space<vmem>>, vector<1x2x32xf32>
    %128 = vector.shape_cast %127 : vector<1x2x32xf32> to vector<2x32xf32>
    %129 = vector.shape_cast %124 : vector<2x32xf32> to vector<1x2x32xf32>
    tpu.vector_store %arg4[%126, %c0_52, %c0_53], %129 {strides = array<i32>} : memref<8x2x32xf32, #tpu.memory_space<vmem>>, vector<1x2x32xf32>,
    %c3_i32 = arith.constant 3 : i32
    %130 = arith.index_cast %c3_i32 : i32 to index
    %c0_54 = arith.constant 0 : index
    %c0_55 = arith.constant 0 : index
    %c0_56 = arith.constant 0 : index
    %131 = vector.load %arg1[%130, %c0_54, %c0_55, %c0_56] : memref<8x3x2x32xf32, #tpu.memory_space<vmem>>, vector<1x3x2x32xf32>
    %132 = vector.shape_cast %131 : vector<1x3x2x32xf32> to vector<3x2x32xf32>
    %c0_57 = arith.constant 0 : index
    %c0_58 = arith.constant 0 : index
    %133 = vector.load %arg5[%c0_57, %c0_58] : memref<2x32xf32, #tpu.memory_space<vmem>>, vector<2x32xf32>
    %cst_59 = arith.constant dense<0.000000e+00> : vector<2x32xf32>
    %134 = tpu.matmul %133, %4, %cst_59 {dimension_numbers = #tpu.dot_dimension_numbers<[1], [0], [0], [1], [0, 0, 1, 1], [], []>} : vector<2x32xf32>, vector<32x32xf32>, vector<2x32xf32> -> vector<2x32xf32>
    %cst_60 = arith.constant dense<0.000000e+00> : vector<2x32xf32>
    %135 = tpu.matmul %133, %6, %cst_60 {dimension_numbers = #tpu.dot_dimension_numbers<[1], [0], [0], [1], [0, 0, 1, 1], [], []>} : vector<2x32xf32>, vector<32x32xf32>, vector<2x32xf32> -> vector<2x32xf32>
    %cst_61 = arith.constant dense<0.000000e+00> : vector<2x32xf32>
    %136 = tpu.matmul %133, %8, %cst_61 {dimension_numbers = #tpu.dot_dimension_numbers<[1], [0], [0], [1], [0, 0, 1, 1], [], []>} : vector<2x32xf32>, vector<32x32xf32>, vector<2x32xf32> -> vector<2x32xf32>
    %137 = vector.broadcast %9 : vector<1x32xf32> to vector<2x32xf32>
    %138 = arith.addf %136, %137 : vector<2x32xf32>
    %139 = vector.extract_strided_slice %132 {offsets = [0, 0, 0], sizes = [1, 2, 32], strides = [1, 1, 1]} : vector<3x2x32xf32> to vector<1x2x32xf32>
    %140 = vector.shape_cast %139 : vector<1x2x32xf32> to vector<2x32xf32>
    %141 = arith.addf %140, %134 : vector<2x32xf32>
    %142 = arith.negf %141 : vector<2x32xf32>
    %143 = math.exp %142 : vector<2x32xf32>
    %cst_62 = arith.constant 1.000000e+00 : f32
    %144 = vector.broadcast %cst_62 : f32 to vector<2x32xf32>
    %145 = arith.addf %144, %143 : vector<2x32xf32>
    %146 = arith.divf %144, %145 : vector<2x32xf32>
    %147 = vector.extract_strided_slice %132 {offsets = [1, 0, 0], sizes = [1, 2, 32], strides = [1, 1, 1]} : vector<3x2x32xf32> to vector<1x2x32xf32>
    %148 = vector.shape_cast %147 : vector<1x2x32xf32> to vector<2x32xf32>
    %149 = arith.addf %148, %135 : vector<2x32xf32>
    %150 = arith.negf %149 : vector<2x32xf32>
    %151 = math.exp %150 : vector<2x32xf32>
    %cst_63 = arith.constant 1.000000e+00 : f32
    %152 = vector.broadcast %cst_63 : f32 to vector<2x32xf32>
    %153 = arith.addf %152, %151 : vector<2x32xf32>
    %154 = arith.divf %152, %153 : vector<2x32xf32>
    %155 = vector.extract_strided_slice %132 {offsets = [2, 0, 0], sizes = [1, 2, 32], strides = [1, 1, 1]} : vector<3x2x32xf32> to vector<1x2x32xf32>
    %156 = vector.shape_cast %155 : vector<1x2x32xf32> to vector<2x32xf32>
    %157 = arith.mulf %146, %138 : vector<2x32xf32>
    %158 = arith.addf %156, %157 : vector<2x32xf32>
    %159 = math.tanh %158 : vector<2x32xf32>
    %cst_64 = arith.constant 1.000000e+00 : f32
    %160 = vector.broadcast %cst_64 : f32 to vector<2x32xf32>
    %161 = arith.subf %160, %154 : vector<2x32xf32>
    %162 = arith.mulf %161, %159 : vector<2x32xf32>
    %163 = arith.mulf %154, %133 : vector<2x32xf32>
    %164 = arith.addf %162, %163 : vector<2x32xf32>
    %c0_65 = arith.constant 0 : index
    %c0_66 = arith.constant 0 : index
    %165 = vector.load %arg5[%c0_65, %c0_66] : memref<2x32xf32, #tpu.memory_space<vmem>>, vector<2x32xf32>
    tpu.vector_store %arg5[%c0_65, %c0_66], %164 {strides = array<i32>} : memref<2x32xf32, #tpu.memory_space<vmem>>, vector<2x32xf32>,
    %166 = arith.index_cast %c3_i32 : i32 to index
    %c0_67 = arith.constant 0 : index
    %c0_68 = arith.constant 0 : index
    %167 = vector.load %arg4[%166, %c0_67, %c0_68] : memref<8x2x32xf32, #tpu.memory_space<vmem>>, vector<1x2x32xf32>
    %168 = vector.shape_cast %167 : vector<1x2x32xf32> to vector<2x32xf32>
    %169 = vector.shape_cast %164 : vector<2x32xf32> to vector<1x2x32xf32>
    tpu.vector_store %arg4[%166, %c0_67, %c0_68], %169 {strides = array<i32>} : memref<8x2x32xf32, #tpu.memory_space<vmem>>, vector<1x2x32xf32>,
    %c4_i32 = arith.constant 4 : i32
    %170 = arith.index_cast %c4_i32 : i32 to index
    %c0_69 = arith.constant 0 : index
    %c0_70 = arith.constant 0 : index
    %c0_71 = arith.constant 0 : index
    %171 = vector.load %arg1[%170, %c0_69, %c0_70, %c0_71] : memref<8x3x2x32xf32, #tpu.memory_space<vmem>>, vector<1x3x2x32xf32>
    %172 = vector.shape_cast %171 : vector<1x3x2x32xf32> to vector<3x2x32xf32>
    %c0_72 = arith.constant 0 : index
    %c0_73 = arith.constant 0 : index
    %173 = vector.load %arg5[%c0_72, %c0_73] : memref<2x32xf32, #tpu.memory_space<vmem>>, vector<2x32xf32>
    %cst_74 = arith.constant dense<0.000000e+00> : vector<2x32xf32>
    %174 = tpu.matmul %173, %4, %cst_74 {dimension_numbers = #tpu.dot_dimension_numbers<[1], [0], [0], [1], [0, 0, 1, 1], [], []>} : vector<2x32xf32>, vector<32x32xf32>, vector<2x32xf32> -> vector<2x32xf32>
    %cst_75 = arith.constant dense<0.000000e+00> : vector<2x32xf32>
    %175 = tpu.matmul %173, %6, %cst_75 {dimension_numbers = #tpu.dot_dimension_numbers<[1], [0], [0], [1], [0, 0, 1, 1], [], []>} : vector<2x32xf32>, vector<32x32xf32>, vector<2x32xf32> -> vector<2x32xf32>
    %cst_76 = arith.constant dense<0.000000e+00> : vector<2x32xf32>
    %176 = tpu.matmul %173, %8, %cst_76 {dimension_numbers = #tpu.dot_dimension_numbers<[1], [0], [0], [1], [0, 0, 1, 1], [], []>} : vector<2x32xf32>, vector<32x32xf32>, vector<2x32xf32> -> vector<2x32xf32>
    %177 = vector.broadcast %9 : vector<1x32xf32> to vector<2x32xf32>
    %178 = arith.addf %176, %177 : vector<2x32xf32>
    %179 = vector.extract_strided_slice %172 {offsets = [0, 0, 0], sizes = [1, 2, 32], strides = [1, 1, 1]} : vector<3x2x32xf32> to vector<1x2x32xf32>
    %180 = vector.shape_cast %179 : vector<1x2x32xf32> to vector<2x32xf32>
    %181 = arith.addf %180, %174 : vector<2x32xf32>
    %182 = arith.negf %181 : vector<2x32xf32>
    %183 = math.exp %182 : vector<2x32xf32>
    %cst_77 = arith.constant 1.000000e+00 : f32
    %184 = vector.broadcast %cst_77 : f32 to vector<2x32xf32>
    %185 = arith.addf %184, %183 : vector<2x32xf32>
    %186 = arith.divf %184, %185 : vector<2x32xf32>
    %187 = vector.extract_strided_slice %172 {offsets = [1, 0, 0], sizes = [1, 2, 32], strides = [1, 1, 1]} : vector<3x2x32xf32> to vector<1x2x32xf32>
    %188 = vector.shape_cast %187 : vector<1x2x32xf32> to vector<2x32xf32>
    %189 = arith.addf %188, %175 : vector<2x32xf32>
    %190 = arith.negf %189 : vector<2x32xf32>
    %191 = math.exp %190 : vector<2x32xf32>
    %cst_78 = arith.constant 1.000000e+00 : f32
    %192 = vector.broadcast %cst_78 : f32 to vector<2x32xf32>
    %193 = arith.addf %192, %191 : vector<2x32xf32>
    %194 = arith.divf %192, %193 : vector<2x32xf32>
    %195 = vector.extract_strided_slice %172 {offsets = [2, 0, 0], sizes = [1, 2, 32], strides = [1, 1, 1]} : vector<3x2x32xf32> to vector<1x2x32xf32>
    %196 = vector.shape_cast %195 : vector<1x2x32xf32> to vector<2x32xf32>
    %197 = arith.mulf %186, %178 : vector<2x32xf32>
    %198 = arith.addf %196, %197 : vector<2x32xf32>
    %199 = math.tanh %198 : vector<2x32xf32>
    %cst_79 = arith.constant 1.000000e+00 : f32
    %200 = vector.broadcast %cst_79 : f32 to vector<2x32xf32>
    %201 = arith.subf %200, %194 : vector<2x32xf32>
    %202 = arith.mulf %201, %199 : vector<2x32xf32>
    %203 = arith.mulf %194, %173 : vector<2x32xf32>
    %204 = arith.addf %202, %203 : vector<2x32xf32>
    %c0_80 = arith.constant 0 : index
    %c0_81 = arith.constant 0 : index
    %205 = vector.load %arg5[%c0_80, %c0_81] : memref<2x32xf32, #tpu.memory_space<vmem>>, vector<2x32xf32>
    tpu.vector_store %arg5[%c0_80, %c0_81], %204 {strides = array<i32>} : memref<2x32xf32, #tpu.memory_space<vmem>>, vector<2x32xf32>,
    %206 = arith.index_cast %c4_i32 : i32 to index
    %c0_82 = arith.constant 0 : index
    %c0_83 = arith.constant 0 : index
    %207 = vector.load %arg4[%206, %c0_82, %c0_83] : memref<8x2x32xf32, #tpu.memory_space<vmem>>, vector<1x2x32xf32>
    %208 = vector.shape_cast %207 : vector<1x2x32xf32> to vector<2x32xf32>
    %209 = vector.shape_cast %204 : vector<2x32xf32> to vector<1x2x32xf32>
    tpu.vector_store %arg4[%206, %c0_82, %c0_83], %209 {strides = array<i32>} : memref<8x2x32xf32, #tpu.memory_space<vmem>>, vector<1x2x32xf32>,
    %c5_i32 = arith.constant 5 : i32
    %210 = arith.index_cast %c5_i32 : i32 to index
    %c0_84 = arith.constant 0 : index
    %c0_85 = arith.constant 0 : index
    %c0_86 = arith.constant 0 : index
    %211 = vector.load %arg1[%210, %c0_84, %c0_85, %c0_86] : memref<8x3x2x32xf32, #tpu.memory_space<vmem>>, vector<1x3x2x32xf32>
    %212 = vector.shape_cast %211 : vector<1x3x2x32xf32> to vector<3x2x32xf32>
    %c0_87 = arith.constant 0 : index
    %c0_88 = arith.constant 0 : index
    %213 = vector.load %arg5[%c0_87, %c0_88] : memref<2x32xf32, #tpu.memory_space<vmem>>, vector<2x32xf32>
    %cst_89 = arith.constant dense<0.000000e+00> : vector<2x32xf32>
    %214 = tpu.matmul %213, %4, %cst_89 {dimension_numbers = #tpu.dot_dimension_numbers<[1], [0], [0], [1], [0, 0, 1, 1], [], []>} : vector<2x32xf32>, vector<32x32xf32>, vector<2x32xf32> -> vector<2x32xf32>
    %cst_90 = arith.constant dense<0.000000e+00> : vector<2x32xf32>
    %215 = tpu.matmul %213, %6, %cst_90 {dimension_numbers = #tpu.dot_dimension_numbers<[1], [0], [0], [1], [0, 0, 1, 1], [], []>} : vector<2x32xf32>, vector<32x32xf32>, vector<2x32xf32> -> vector<2x32xf32>
    %cst_91 = arith.constant dense<0.000000e+00> : vector<2x32xf32>
    %216 = tpu.matmul %213, %8, %cst_91 {dimension_numbers = #tpu.dot_dimension_numbers<[1], [0], [0], [1], [0, 0, 1, 1], [], []>} : vector<2x32xf32>, vector<32x32xf32>, vector<2x32xf32> -> vector<2x32xf32>
    %217 = vector.broadcast %9 : vector<1x32xf32> to vector<2x32xf32>
    %218 = arith.addf %216, %217 : vector<2x32xf32>
    %219 = vector.extract_strided_slice %212 {offsets = [0, 0, 0], sizes = [1, 2, 32], strides = [1, 1, 1]} : vector<3x2x32xf32> to vector<1x2x32xf32>
    %220 = vector.shape_cast %219 : vector<1x2x32xf32> to vector<2x32xf32>
    %221 = arith.addf %220, %214 : vector<2x32xf32>
    %222 = arith.negf %221 : vector<2x32xf32>
    %223 = math.exp %222 : vector<2x32xf32>
    %cst_92 = arith.constant 1.000000e+00 : f32
    %224 = vector.broadcast %cst_92 : f32 to vector<2x32xf32>
    %225 = arith.addf %224, %223 : vector<2x32xf32>
    %226 = arith.divf %224, %225 : vector<2x32xf32>
    %227 = vector.extract_strided_slice %212 {offsets = [1, 0, 0], sizes = [1, 2, 32], strides = [1, 1, 1]} : vector<3x2x32xf32> to vector<1x2x32xf32>
    %228 = vector.shape_cast %227 : vector<1x2x32xf32> to vector<2x32xf32>
    %229 = arith.addf %228, %215 : vector<2x32xf32>
    %230 = arith.negf %229 : vector<2x32xf32>
    %231 = math.exp %230 : vector<2x32xf32>
    %cst_93 = arith.constant 1.000000e+00 : f32
    %232 = vector.broadcast %cst_93 : f32 to vector<2x32xf32>
    %233 = arith.addf %232, %231 : vector<2x32xf32>
    %234 = arith.divf %232, %233 : vector<2x32xf32>
    %235 = vector.extract_strided_slice %212 {offsets = [2, 0, 0], sizes = [1, 2, 32], strides = [1, 1, 1]} : vector<3x2x32xf32> to vector<1x2x32xf32>
    %236 = vector.shape_cast %235 : vector<1x2x32xf32> to vector<2x32xf32>
    %237 = arith.mulf %226, %218 : vector<2x32xf32>
    %238 = arith.addf %236, %237 : vector<2x32xf32>
    %239 = math.tanh %238 : vector<2x32xf32>
    %cst_94 = arith.constant 1.000000e+00 : f32
    %240 = vector.broadcast %cst_94 : f32 to vector<2x32xf32>
    %241 = arith.subf %240, %234 : vector<2x32xf32>
    %242 = arith.mulf %241, %239 : vector<2x32xf32>
    %243 = arith.mulf %234, %213 : vector<2x32xf32>
    %244 = arith.addf %242, %243 : vector<2x32xf32>
    %c0_95 = arith.constant 0 : index
    %c0_96 = arith.constant 0 : index
    %245 = vector.load %arg5[%c0_95, %c0_96] : memref<2x32xf32, #tpu.memory_space<vmem>>, vector<2x32xf32>
    tpu.vector_store %arg5[%c0_95, %c0_96], %244 {strides = array<i32>} : memref<2x32xf32, #tpu.memory_space<vmem>>, vector<2x32xf32>,
    %246 = arith.index_cast %c5_i32 : i32 to index
    %c0_97 = arith.constant 0 : index
    %c0_98 = arith.constant 0 : index
    %247 = vector.load %arg4[%246, %c0_97, %c0_98] : memref<8x2x32xf32, #tpu.memory_space<vmem>>, vector<1x2x32xf32>
    %248 = vector.shape_cast %247 : vector<1x2x32xf32> to vector<2x32xf32>
    %249 = vector.shape_cast %244 : vector<2x32xf32> to vector<1x2x32xf32>
    tpu.vector_store %arg4[%246, %c0_97, %c0_98], %249 {strides = array<i32>} : memref<8x2x32xf32, #tpu.memory_space<vmem>>, vector<1x2x32xf32>,
    %c6_i32 = arith.constant 6 : i32
    %250 = arith.index_cast %c6_i32 : i32 to index
    %c0_99 = arith.constant 0 : index
    %c0_100 = arith.constant 0 : index
    %c0_101 = arith.constant 0 : index
    %251 = vector.load %arg1[%250, %c0_99, %c0_100, %c0_101] : memref<8x3x2x32xf32, #tpu.memory_space<vmem>>, vector<1x3x2x32xf32>
    %252 = vector.shape_cast %251 : vector<1x3x2x32xf32> to vector<3x2x32xf32>
    %c0_102 = arith.constant 0 : index
    %c0_103 = arith.constant 0 : index
    %253 = vector.load %arg5[%c0_102, %c0_103] : memref<2x32xf32, #tpu.memory_space<vmem>>, vector<2x32xf32>
    %cst_104 = arith.constant dense<0.000000e+00> : vector<2x32xf32>
    %254 = tpu.matmul %253, %4, %cst_104 {dimension_numbers = #tpu.dot_dimension_numbers<[1], [0], [0], [1], [0, 0, 1, 1], [], []>} : vector<2x32xf32>, vector<32x32xf32>, vector<2x32xf32> -> vector<2x32xf32>
    %cst_105 = arith.constant dense<0.000000e+00> : vector<2x32xf32>
    %255 = tpu.matmul %253, %6, %cst_105 {dimension_numbers = #tpu.dot_dimension_numbers<[1], [0], [0], [1], [0, 0, 1, 1], [], []>} : vector<2x32xf32>, vector<32x32xf32>, vector<2x32xf32> -> vector<2x32xf32>
    %cst_106 = arith.constant dense<0.000000e+00> : vector<2x32xf32>
    %256 = tpu.matmul %253, %8, %cst_106 {dimension_numbers = #tpu.dot_dimension_numbers<[1], [0], [0], [1], [0, 0, 1, 1], [], []>} : vector<2x32xf32>, vector<32x32xf32>, vector<2x32xf32> -> vector<2x32xf32>
    %257 = vector.broadcast %9 : vector<1x32xf32> to vector<2x32xf32>
    %258 = arith.addf %256, %257 : vector<2x32xf32>
    %259 = vector.extract_strided_slice %252 {offsets = [0, 0, 0], sizes = [1, 2, 32], strides = [1, 1, 1]} : vector<3x2x32xf32> to vector<1x2x32xf32>
    %260 = vector.shape_cast %259 : vector<1x2x32xf32> to vector<2x32xf32>
    %261 = arith.addf %260, %254 : vector<2x32xf32>
    %262 = arith.negf %261 : vector<2x32xf32>
    %263 = math.exp %262 : vector<2x32xf32>
    %cst_107 = arith.constant 1.000000e+00 : f32
    %264 = vector.broadcast %cst_107 : f32 to vector<2x32xf32>
    %265 = arith.addf %264, %263 : vector<2x32xf32>
    %266 = arith.divf %264, %265 : vector<2x32xf32>
    %267 = vector.extract_strided_slice %252 {offsets = [1, 0, 0], sizes = [1, 2, 32], strides = [1, 1, 1]} : vector<3x2x32xf32> to vector<1x2x32xf32>
    %268 = vector.shape_cast %267 : vector<1x2x32xf32> to vector<2x32xf32>
    %269 = arith.addf %268, %255 : vector<2x32xf32>
    %270 = arith.negf %269 : vector<2x32xf32>
    %271 = math.exp %270 : vector<2x32xf32>
    %cst_108 = arith.constant 1.000000e+00 : f32
    %272 = vector.broadcast %cst_108 : f32 to vector<2x32xf32>
    %273 = arith.addf %272, %271 : vector<2x32xf32>
    %274 = arith.divf %272, %273 : vector<2x32xf32>
    %275 = vector.extract_strided_slice %252 {offsets = [2, 0, 0], sizes = [1, 2, 32], strides = [1, 1, 1]} : vector<3x2x32xf32> to vector<1x2x32xf32>
    %276 = vector.shape_cast %275 : vector<1x2x32xf32> to vector<2x32xf32>
    %277 = arith.mulf %266, %258 : vector<2x32xf32>
    %278 = arith.addf %276, %277 : vector<2x32xf32>
    %279 = math.tanh %278 : vector<2x32xf32>
    %cst_109 = arith.constant 1.000000e+00 : f32
    %280 = vector.broadcast %cst_109 : f32 to vector<2x32xf32>
    %281 = arith.subf %280, %274 : vector<2x32xf32>
    %282 = arith.mulf %281, %279 : vector<2x32xf32>
    %283 = arith.mulf %274, %253 : vector<2x32xf32>
    %284 = arith.addf %282, %283 : vector<2x32xf32>
    %c0_110 = arith.constant 0 : index
    %c0_111 = arith.constant 0 : index
    %285 = vector.load %arg5[%c0_110, %c0_111] : memref<2x32xf32, #tpu.memory_space<vmem>>, vector<2x32xf32>
    tpu.vector_store %arg5[%c0_110, %c0_111], %284 {strides = array<i32>} : memref<2x32xf32, #tpu.memory_space<vmem>>, vector<2x32xf32>,
    %286 = arith.index_cast %c6_i32 : i32 to index
    %c0_112 = arith.constant 0 : index
    %c0_113 = arith.constant 0 : index
    %287 = vector.load %arg4[%286, %c0_112, %c0_113] : memref<8x2x32xf32, #tpu.memory_space<vmem>>, vector<1x2x32xf32>
    %288 = vector.shape_cast %287 : vector<1x2x32xf32> to vector<2x32xf32>
    %289 = vector.shape_cast %284 : vector<2x32xf32> to vector<1x2x32xf32>
    tpu.vector_store %arg4[%286, %c0_112, %c0_113], %289 {strides = array<i32>} : memref<8x2x32xf32, #tpu.memory_space<vmem>>, vector<1x2x32xf32>,
    %c7_i32 = arith.constant 7 : i32
    %290 = arith.index_cast %c7_i32 : i32 to index
    %c0_114 = arith.constant 0 : index
    %c0_115 = arith.constant 0 : index
    %c0_116 = arith.constant 0 : index
    %291 = vector.load %arg1[%290, %c0_114, %c0_115, %c0_116] : memref<8x3x2x32xf32, #tpu.memory_space<vmem>>, vector<1x3x2x32xf32>
    %292 = vector.shape_cast %291 : vector<1x3x2x32xf32> to vector<3x2x32xf32>
    %c0_117 = arith.constant 0 : index
    %c0_118 = arith.constant 0 : index
    %293 = vector.load %arg5[%c0_117, %c0_118] : memref<2x32xf32, #tpu.memory_space<vmem>>, vector<2x32xf32>
    %cst_119 = arith.constant dense<0.000000e+00> : vector<2x32xf32>
    %294 = tpu.matmul %293, %4, %cst_119 {dimension_numbers = #tpu.dot_dimension_numbers<[1], [0], [0], [1], [0, 0, 1, 1], [], []>} : vector<2x32xf32>, vector<32x32xf32>, vector<2x32xf32> -> vector<2x32xf32>
    %cst_120 = arith.constant dense<0.000000e+00> : vector<2x32xf32>
    %295 = tpu.matmul %293, %6, %cst_120 {dimension_numbers = #tpu.dot_dimension_numbers<[1], [0], [0], [1], [0, 0, 1, 1], [], []>} : vector<2x32xf32>, vector<32x32xf32>, vector<2x32xf32> -> vector<2x32xf32>
    %cst_121 = arith.constant dense<0.000000e+00> : vector<2x32xf32>
    %296 = tpu.matmul %293, %8, %cst_121 {dimension_numbers = #tpu.dot_dimension_numbers<[1], [0], [0], [1], [0, 0, 1, 1], [], []>} : vector<2x32xf32>, vector<32x32xf32>, vector<2x32xf32> -> vector<2x32xf32>
    %297 = vector.broadcast %9 : vector<1x32xf32> to vector<2x32xf32>
    %298 = arith.addf %296, %297 : vector<2x32xf32>
    %299 = vector.extract_strided_slice %292 {offsets = [0, 0, 0], sizes = [1, 2, 32], strides = [1, 1, 1]} : vector<3x2x32xf32> to vector<1x2x32xf32>
    %300 = vector.shape_cast %299 : vector<1x2x32xf32> to vector<2x32xf32>
    %301 = arith.addf %300, %294 : vector<2x32xf32>
    %302 = arith.negf %301 : vector<2x32xf32>
    %303 = math.exp %302 : vector<2x32xf32>
    %cst_122 = arith.constant 1.000000e+00 : f32
    %304 = vector.broadcast %cst_122 : f32 to vector<2x32xf32>
    %305 = arith.addf %304, %303 : vector<2x32xf32>
    %306 = arith.divf %304, %305 : vector<2x32xf32>
    %307 = vector.extract_strided_slice %292 {offsets = [1, 0, 0], sizes = [1, 2, 32], strides = [1, 1, 1]} : vector<3x2x32xf32> to vector<1x2x32xf32>
    %308 = vector.shape_cast %307 : vector<1x2x32xf32> to vector<2x32xf32>
    %309 = arith.addf %308, %295 : vector<2x32xf32>
    %310 = arith.negf %309 : vector<2x32xf32>
    %311 = math.exp %310 : vector<2x32xf32>
    %cst_123 = arith.constant 1.000000e+00 : f32
    %312 = vector.broadcast %cst_123 : f32 to vector<2x32xf32>
    %313 = arith.addf %312, %311 : vector<2x32xf32>
    %314 = arith.divf %312, %313 : vector<2x32xf32>
    %315 = vector.extract_strided_slice %292 {offsets = [2, 0, 0], sizes = [1, 2, 32], strides = [1, 1, 1]} : vector<3x2x32xf32> to vector<1x2x32xf32>
    %316 = vector.shape_cast %315 : vector<1x2x32xf32> to vector<2x32xf32>
    %317 = arith.mulf %306, %298 : vector<2x32xf32>
    %318 = arith.addf %316, %317 : vector<2x32xf32>
    %319 = math.tanh %318 : vector<2x32xf32>
    %cst_124 = arith.constant 1.000000e+00 : f32
    %320 = vector.broadcast %cst_124 : f32 to vector<2x32xf32>
    %321 = arith.subf %320, %314 : vector<2x32xf32>
    %322 = arith.mulf %321, %319 : vector<2x32xf32>
    %323 = arith.mulf %314, %293 : vector<2x32xf32>
    %324 = arith.addf %322, %323 : vector<2x32xf32>
    %c0_125 = arith.constant 0 : index
    %c0_126 = arith.constant 0 : index
    %325 = vector.load %arg5[%c0_125, %c0_126] : memref<2x32xf32, #tpu.memory_space<vmem>>, vector<2x32xf32>
    tpu.vector_store %arg5[%c0_125, %c0_126], %324 {strides = array<i32>} : memref<2x32xf32, #tpu.memory_space<vmem>>, vector<2x32xf32>,
    %326 = arith.index_cast %c7_i32 : i32 to index
    %c0_127 = arith.constant 0 : index
    %c0_128 = arith.constant 0 : index
    %327 = vector.load %arg4[%326, %c0_127, %c0_128] : memref<8x2x32xf32, #tpu.memory_space<vmem>>, vector<1x2x32xf32>
    %328 = vector.shape_cast %327 : vector<1x2x32xf32> to vector<2x32xf32>
    %329 = vector.shape_cast %324 : vector<2x32xf32> to vector<1x2x32xf32>
    tpu.vector_store %arg4[%326, %c0_127, %c0_128], %329 {strides = array<i32>} : memref<8x2x32xf32, #tpu.memory_space<vmem>>, vector<1x2x32xf32>,
    %c8_i32 = arith.constant 8 : i32
    return
  }
  func.func @transform_0(%arg0: i32) -> (i32, i32, i32, i32) {
    %c0_i32 = arith.constant 0 : i32
    %c0_i32_0 = arith.constant 0 : i32
    %c0_i32_1 = arith.constant 0 : i32
    %c0_i32_2 = arith.constant 0 : i32
    return %arg0, %c0_i32, %c0_i32_0, %c0_i32_1 : i32, i32, i32, i32
  }
  func.func @transform_1(%arg0: i32) -> (i32, i32, i32) {
    %c0_i32 = arith.constant 0 : i32
    %c0_i32_0 = arith.constant 0 : i32
    %c0_i32_1 = arith.constant 0 : i32
    %c0_i32_2 = arith.constant 0 : i32
    return %c0_i32, %c0_i32_0, %c0_i32_1 : i32, i32, i32
  }
  func.func @transform_2(%arg0: i32) -> (i32, i32) {
    %c0_i32 = arith.constant 0 : i32
    %c0_i32_0 = arith.constant 0 : i32
    %c0_i32_1 = arith.constant 0 : i32
    return %c0_i32, %c0_i32_0 : i32, i32
  }
  func.func @transform_3(%arg0: i32) -> (i32, i32, i32) {
    %c0_i32 = arith.constant 0 : i32
    %c0_i32_0 = arith.constant 0 : i32
    %c0_i32_1 = arith.constant 0 : i32
    return %arg0, %c0_i32, %c0_i32_0 : i32, i32, i32
  }
}

</mosaic_0001>

<llo_original>
// kernel: encoder_rnn_forward.2
$region0: #{encoder_rnn_forward.2}
  #allocation0 [shape = 'u32[]', space=smem, size = 0x4, offset = 0x4, fixed_abs, tag = 'smem constant byte address 0x4 - core index']
  #allocation1 [shape = 'u32[144,128]{1,0:T(1,128)}', space=vmem, size = 0x12000, scoped, tag = 'internal scratch']
  #allocation2 [shape = 'f32[2,32]{1,0:T(2,128)}', space=vmem, size = 0x400, scoped, tag = 'scratch operand']
  %s0 = inlined_call_operand.vmem [shape: f32[8,3,2,32], index: 0, kind: input, shape index: {}]
  %s1 = inlined_call_operand.vmem [shape: f32[3,32,32], index: 1, kind: input, shape index: {}]
  %s2 = inlined_call_operand.vmem [shape: f32[1,32], index: 2, kind: input, shape index: {}]
  %s3 = inlined_call_operand.vmem [shape: f32[8,2,32], index: 3, kind: output, shape index: {}]
  %s4 = sld [smem:[#allocation0]]
  $region26: #{encoder_rnn_forward.2} parent=0
    _
  %s6 = ssub.s32 1, %s4
  %s7 = scalar_select 0, %s6, %s4
  // Predicated region
  $region2: #{encoder_rnn_forward.2} parent=0 // pred_check
    _
  $region3: #{encoder_rnn_forward.2} parent=0 // pred_check_branch
    %9 = sbr.rel (0) target = $region5
  $region4: #{encoder_rnn_forward.2} parent=0 // pred_region
    _
  $region5: #{encoder_rnn_forward.2} parent=0 // pred_fallthru
    _
  // Predicated region
  $region6: #{encoder_rnn_forward.2} parent=0 // pred_check
    _
  $region7: #{encoder_rnn_forward.2} parent=0 // pred_check_branch
    %11 = sbr.rel (0) target = $region9
  $region8: #{encoder_rnn_forward.2} parent=0 // pred_region
    _
  $region9: #{encoder_rnn_forward.2} parent=0 // pred_fallthru
    _
  // Predicated region
  $region10: #{encoder_rnn_forward.2} parent=0 // pred_check
    _
  $region11: #{encoder_rnn_forward.2} parent=0 // pred_check_branch
    %13 = sbr.rel (0) target = $region13
  $region12: #{encoder_rnn_forward.2} parent=0 // pred_region
    _
  $region13: #{encoder_rnn_forward.2} parent=0 // pred_fallthru
    _
  %p14 = scmp.eq.s32.totalorder 0, 0
  // Predicated region
  $region14: #{encoder_rnn_forward.2} parent=0 // pred_check
    %p15 = pneg %p14
  $region15: #{encoder_rnn_forward.2} parent=0 // pred_check_branch
    %17 = sbr.rel (%p15) target = $region17
  $region16: #{encoder_rnn_forward.2} parent=0 // pred_region
    %vm18 = vcmask 254976
    %19 = vst.msk [vmem:[#allocation2] sm:$0x3] %vm18, 0.0
  $region17: #{encoder_rnn_forward.2} parent=0 // pred_fallthru
    _
  %v20 = vld [vmem:[%s1] sm:$0xff]
  %v21 = vld [vmem:[%s1 + $0x8] sm:$0xff]
  %v22 = vld [vmem:[%s1 + $0x10] sm:$0xff]
  %v23 = vld [vmem:[%s1 + $0x18] sm:$0xff]
  %s24 = scalar_lea.vmem %s1, 32
  %v25 = vld [vmem:[%s24] sm:$0xff]
  %v26 = vld [vmem:[%s24 + $0x8] sm:$0xff]
  %v27 = vld [vmem:[%s24 + $0x10] sm:$0xff]
  %v28 = vld [vmem:[%s24 + $0x18] sm:$0xff]
  %s29 = scalar_lea.vmem %s1, 64
  %v30 = vld [vmem:[%s29] sm:$0xff]
  %v31 = vld [vmem:[%s29 + $0x8] sm:$0xff]
  %v32 = vld [vmem:[%s29 + $0x10] sm:$0xff]
  %v33 = vld [vmem:[%s29 + $0x18] sm:$0xff]
  %v34 = vld [vmem:[%s2] sm:$0x1]
  %v35 = vld [vmem:[%s0] sm:$0x3]
  %v36 = vld [vmem:[%s0 + $0x2] sm:$0x3]
  %v37 = vld [vmem:[%s0 + $0x4] sm:$0x3]
  %v38 = vld [vmem:[#allocation2] sm:$0x3]
  %vm39 = vcmask 261120
  %v41 = vsel %vm39, %v38, 0
  %43 = vmatprep.subr.mxu0 0.0
  %44 = vmatpush1.msra.mxu0 0.0
  %45 = vmatprep.subr.mxu0 0.0
  %46 = vmatpush1.msra.mxu0 0.0
  %47 = vmatprep.subr.mxu0 0.0
  %48 = vmatpush1.msra.mxu0 0.0
  %49 = vmatprep.subr.mxu0 0.0
  %50 = vmatpush1.msra.mxu0 0.0
  %51 = vmatprep.subr.mxu0 0.0
  %52 = vmatpush1.msra.mxu0 0.0
  %53 = vmatprep.subr.mxu0 0.0
  %54 = vmatpush1.msra.mxu0 0.0
  %55 = vmatprep.subr.mxu0 0.0
  %56 = vmatpush1.msra.mxu0 0.0
  %57 = vmatprep.subr.mxu0 0.0
  %58 = vmatpush1.msra.mxu0 0.0
  %59 = vmatprep.subr.mxu0 0.0
  %60 = vmatpush1.msra.mxu0 0.0
  %61 = vmatprep.subr.mxu0 0.0
  %62 = vmatpush1.msra.mxu0 0.0
  %63 = vmatprep.subr.mxu0 0.0
  %64 = vmatpush1.msra.mxu0 0.0
  %65 = vmatprep.subr.mxu0 0.0
  %66 = vmatpush1.msra.mxu0 0.0
  %67 = vmatprep.subr.mxu0 0.0
  %68 = vmatpush1.msra.mxu0 %v23
  %69 = vmatprep.subr.mxu0 0.0
  %70 = vmatpush1.msra.mxu0 %v22
  %71 = vmatprep.subr.mxu0 0.0
  %72 = vmatpush1.msra.mxu0 %v21
  %73 = vmatprep.subr.mxu0 0.0
  %74 = vmatpush1.msra.mxu0 %v20
  %75 = vmatprep.subr.mxu0 0.0
  %76 = vmatpush2.msra.mxu0 0.0
  %77 = vmatprep.subr.mxu0 0.0
  %78 = vmatpush2.msra.mxu0 0.0
  %79 = vmatprep.subr.mxu0 0.0
  %80 = vmatpush2.msra.mxu0 0.0
  %81 = vmatprep.subr.mxu0 0.0
  %82 = vmatpush2.msra.mxu0 0.0
  %83 = vmatprep.subr.mxu0 0.0
  %84 = vmatpush2.msra.mxu0 0.0
  %85 = vmatprep.subr.mxu0 0.0
  %86 = vmatpush2.msra.mxu0 0.0
  %87 = vmatprep.subr.mxu0 0.0
  %88 = vmatpush2.msra.mxu0 0.0
  %89 = vmatprep.subr.mxu0 0.0
  %90 = vmatpush2.msra.mxu0 0.0
  %91 = vmatprep.subr.mxu0 0.0
  %92 = vmatpush2.msra.mxu0 0.0
  %93 = vmatprep.subr.mxu0 0.0
  %94 = vmatpush2.msra.mxu0 0.0
  %95 = vmatprep.subr.mxu0 0.0
  %96 = vmatpush2.msra.mxu0 0.0
  %97 = vmatprep.subr.mxu0 0.0
  %98 = vmatpush2.msra.mxu0 0.0
  %99 = vmatprep.subr.mxu0 0.0
  %100 = vmatpush2.msra.mxu0 0.0
  %101 = vmatprep.subr.mxu0 0.0
  %102 = vmatpush2.msra.mxu0 0.0
  %103 = vmatprep.subr.mxu0 0.0
  %104 = vmatpush2.msra.mxu0 0.0
  %105 = vmatprep.subr.mxu0 0.0
  %106 = vmatpush2.msra.mxu0 0.0
  %107 = vmatprep.mubr.f32.mxu0 0.0
  %108 = vmatmul.mubr.f32.gmra.mxu0 %v41
  %v109 = vpop.f32.mrf.mxu0
  %v110 = vadd.f32 0.0, %v109
  %v111 = vpop.f32.mrf.mxu0
  %112 = vdwg.mxu0
  %113 = vmatprep.subr.mxu0 0.0
  %114 = vmatpush1.msra.mxu0 0.0
  %115 = vmatprep.subr.mxu0 0.0
  %116 = vmatpush1.msra.mxu0 0.0
  %117 = vmatprep.subr.mxu0 0.0
  %118 = vmatpush1.msra.mxu0 0.0
  %119 = vmatprep.subr.mxu0 0.0
  %120 = vmatpush1.msra.mxu0 0.0
  %121 = vmatprep.subr.mxu0 0.0
  %122 = vmatpush1.msra.mxu0 0.0
  %123 = vmatprep.subr.mxu0 0.0
  %124 = vmatpush1.msra.mxu0 0.0
  %125 = vmatprep.subr.mxu0 0.0
  %126 = vmatpush1.msra.mxu0 0.0
  %127 = vmatprep.subr.mxu0 0.0
  %128 = vmatpush1.msra.mxu0 0.0
  %129 = vmatprep.subr.mxu0 0.0
  %130 = vmatpush1.msra.mxu0 0.0
  %131 = vmatprep.subr.mxu0 0.0
  %132 = vmatpush1.msra.mxu0 0.0
  %133 = vmatprep.subr.mxu0 0.0
  %134 = vmatpush1.msra.mxu0 0.0
  %135 = vmatprep.subr.mxu0 0.0
  %136 = vmatpush1.msra.mxu0 0.0
  %137 = vmatprep.subr.mxu0 0.0
  %138 = vmatpush1.msra.mxu0 %v28
  %139 = vmatprep.subr.mxu0 0.0
  %140 = vmatpush1.msra.mxu0 %v27
  %141 = vmatprep.subr.mxu0 0.0
  %142 = vmatpush1.msra.mxu0 %v26
  %143 = vmatprep.subr.mxu0 0.0
  %144 = vmatpush1.msra.mxu0 %v25
  %145 = vmatprep.subr.mxu0 0.0
  %146 = vmatpush2.msra.mxu0 0.0
  %147 = vmatprep.subr.mxu0 0.0
  %148 = vmatpush2.msra.mxu0 0.0
  %149 = vmatprep.subr.mxu0 0.0
  %150 = vmatpush2.msra.mxu0 0.0
  %151 = vmatprep.subr.mxu0 0.0
  %152 = vmatpush2.msra.mxu0 0.0
  %153 = vmatprep.subr.mxu0 0.0
  %154 = vmatpush2.msra.mxu0 0.0
  %155 = vmatprep.subr.mxu0 0.0
  %156 = vmatpush2.msra.mxu0 0.0
  %157 = vmatprep.subr.mxu0 0.0
  %158 = vmatpush2.msra.mxu0 0.0
  %159 = vmatprep.subr.mxu0 0.0
  %160 = vmatpush2.msra.mxu0 0.0
  %161 = vmatprep.subr.mxu0 0.0
  %162 = vmatpush2.msra.mxu0 0.0
  %163 = vmatprep.subr.mxu0 0.0
  %164 = vmatpush2.msra.mxu0 0.0
  %165 = vmatprep.subr.mxu0 0.0
  %166 = vmatpush2.msra.mxu0 0.0
  %167 = vmatprep.subr.mxu0 0.0
  %168 = vmatpush2.msra.mxu0 0.0
  %169 = vmatprep.subr.mxu0 0.0
  %170 = vmatpush2.msra.mxu0 0.0
  %171 = vmatprep.subr.mxu0 0.0
  %172 = vmatpush2.msra.mxu0 0.0
  %173 = vmatprep.subr.mxu0 0.0
  %174 = vmatpush2.msra.mxu0 0.0
  %175 = vmatprep.subr.mxu0 0.0
  %176 = vmatpush2.msra.mxu0 0.0
  %177 = vmatprep.mubr.f32.mxu0 0.0
  %178 = vmatmul.mubr.f32.gmra.mxu0 %v41
  %v179 = vpop.f32.mrf.mxu0
  %v180 = vadd.f32 0.0, %v179
  %v181 = vpop.f32.mrf.mxu0
  %182 = vdwg.mxu0
  %v184 = vlaneseq
  %v185 = vshrl.u32 %v184, 7
  %v186 = vsub.s32 0, %v185
  %v187 = vrot.slane %v34, %v186
  %189 = vmatprep.subr.mxu0 0.0
  %190 = vmatpush1.msra.mxu0 0.0
  %191 = vmatprep.subr.mxu0 0.0
  %192 = vmatpush1.msra.mxu0 0.0
  %193 = vmatprep.subr.mxu0 0.0
  %194 = vmatpush1.msra.mxu0 0.0
  %195 = vmatprep.subr.mxu0 0.0
  %196 = vmatpush1.msra.mxu0 0.0
  %197 = vmatprep.subr.mxu0 0.0
  %198 = vmatpush1.msra.mxu0 0.0
  %199 = vmatprep.subr.mxu0 0.0
  %200 = vmatpush1.msra.mxu0 0.0
  %201 = vmatprep.subr.mxu0 0.0
  %202 = vmatpush1.msra.mxu0 0.0
  %203 = vmatprep.subr.mxu0 0.0
  %204 = vmatpush1.msra.mxu0 0.0
  %205 = vmatprep.subr.mxu0 0.0
  %206 = vmatpush1.msra.mxu0 0.0
  %207 = vmatprep.subr.mxu0 0.0
  %208 = vmatpush1.msra.mxu0 0.0
  %209 = vmatprep.subr.mxu0 0.0
  %210 = vmatpush1.msra.mxu0 0.0
  %211 = vmatprep.subr.mxu0 0.0
  %212 = vmatpush1.msra.mxu0 0.0
  %213 = vmatprep.subr.mxu0 0.0
  %214 = vmatpush1.msra.mxu0 %v33
  %215 = vmatprep.subr.mxu0 0.0
  %216 = vmatpush1.msra.mxu0 %v32
  %217 = vmatprep.subr.mxu0 0.0
  %218 = vmatpush1.msra.mxu0 %v31
  %219 = vmatprep.subr.mxu0 0.0
  %220 = vmatpush1.msra.mxu0 %v30
  %221 = vmatprep.subr.mxu0 0.0
  %222 = vmatpush2.msra.mxu0 0.0
  %223 = vmatprep.subr.mxu0 0.0
  %224 = vmatpush2.msra.mxu0 0.0
  %225 = vmatprep.subr.mxu0 0.0
  %226 = vmatpush2.msra.mxu0 0.0
  %227 = vmatprep.subr.mxu0 0.0
  %228 = vmatpush2.msra.mxu0 0.0
  %229 = vmatprep.subr.mxu0 0.0
  %230 = vmatpush2.msra.mxu0 0.0
  %231 = vmatprep.subr.mxu0 0.0
  %232 = vmatpush2.msra.mxu0 0.0
  %233 = vmatprep.subr.mxu0 0.0
  %234 = vmatpush2.msra.mxu0 0.0
  %235 = vmatprep.subr.mxu0 0.0
  %236 = vmatpush2.msra.mxu0 0.0
  %237 = vmatprep.subr.mxu0 0.0
  %238 = vmatpush2.msra.mxu0 0.0
  %239 = vmatprep.subr.mxu0 0.0
  %240 = vmatpush2.msra.mxu0 0.0
  %241 = vmatprep.subr.mxu0 0.0
  %242 = vmatpush2.msra.mxu0 0.0
  %243 = vmatprep.subr.mxu0 0.0
  %244 = vmatpush2.msra.mxu0 0.0
  %245 = vmatprep.subr.mxu0 0.0
  %246 = vmatpush2.msra.mxu0 0.0
  %247 = vmatprep.subr.mxu0 0.0
  %248 = vmatpush2.msra.mxu0 0.0
  %249 = vmatprep.subr.mxu0 0.0
  %250 = vmatpush2.msra.mxu0 0.0
  %251 = vmatprep.subr.mxu0 0.0
  %252 = vmatpush2.msra.mxu0 0.0
  %253 = vmatprep.mubr.f32.mxu0 0.0
  %254 = vmatmul.mubr.f32.gmra.mxu0 %v41
  %v255 = vpop.f32.mrf.mxu0
  %v256 = vadd.f32 %v187, %v255
  %v257 = vpop.f32.mrf.mxu0
  %258 = vdwg.mxu0
  %v259 = vadd.f32 %v35, %v110
  %v260 = vxor.u32 %v259, 2147483648
  %v261 = vmul.f32 %v260, 1.442695
  %v262 = vpow.pop %v261
  %v263 = vadd.f32 %v262, 1.0
  %v264 = vrcp.pop %v263
  %v265 = vmul.f32 1.0, %v264
  %v266 = vadd.f32 %v36, %v180
  %v267 = vxor.u32 %v266, 2147483648
  %v268 = vmul.f32 %v267, 1.442695
  %v269 = vpow.pop %v268
  %v270 = vadd.f32 %v269, 1.0
  %v271 = vrcp.pop %v270
  %v272 = vmul.f32 1.0, %v271
  %v273 = vmul.f32 %v265, %v256
  %v274 = vadd.f32 %v37, %v273
  %v275 = vtanh.pop %v274
  %v276 = vsub.f32 1.0, %v272
  %v277 = vmul.f32 %v276, %v275
  %v278 = vmul.f32 %v272, %v38
  %v279 = vadd.f32 %v277, %v278
  %vm280 = vcmask 254976
  %281 = vst.msk [vmem:[#allocation2] sm:$0x3] %vm280, %v279
  %282 = vst.msk [vmem:[%s3] sm:$0x3] %vm280, %v279
  %s283 = scalar_lea.vmem %s0, 6
  %v284 = vld [vmem:[%s283] sm:$0x3]
  %v285 = vld [vmem:[%s283 + $0x2] sm:$0x3]
  %v286 = vld [vmem:[%s283 + $0x4] sm:$0x3]
  %v287 = vld [vmem:[#allocation2] sm:$0x3]
  %v289 = vsel %vm39, %v287, 0
  %291 = vmatprep.subr.mxu0 0.0
  %292 = vmatpush1.msra.mxu0 0.0
  %293 = vmatprep.subr.mxu0 0.0
  %294 = vmatpush1.msra.mxu0 0.0
  %295 = vmatprep.subr.mxu0 0.0
  %296 = vmatpush1.msra.mxu0 0.0
  %297 = vmatprep.subr.mxu0 0.0
  %298 = vmatpush1.msra.mxu0 0.0
  %299 = vmatprep.subr.mxu0 0.0
  %300 = vmatpush1.msra.mxu0 0.0
  %301 = vmatprep.subr.mxu0 0.0
  %302 = vmatpush1.msra.mxu0 0.0
  %303 = vmatprep.subr.mxu0 0.0
  %304 = vmatpush1.msra.mxu0 0.0
  %305 = vmatprep.subr.mxu0 0.0
  %306 = vmatpush1.msra.mxu0 0.0
  %307 = vmatprep.subr.mxu0 0.0
  %308 = vmatpush1.msra.mxu0 0.0
  %309 = vmatprep.subr.mxu0 0.0
  %310 = vmatpush1.msra.mxu0 0.0
  %311 = vmatprep.subr.mxu0 0.0
  %312 = vmatpush1.msra.mxu0 0.0
  %313 = vmatprep.subr.mxu0 0.0
  %314 = vmatpush1.msra.mxu0 0.0
  %315 = vmatprep.subr.mxu0 0.0
  %316 = vmatpush1.msra.mxu0 %v23
  %317 = vmatprep.subr.mxu0 0.0
  %318 = vmatpush1.msra.mxu0 %v22
  %319 = vmatprep.subr.mxu0 0.0
  %320 = vmatpush1.msra.mxu0 %v21
  %321 = vmatprep.subr.mxu0 0.0
  %322 = vmatpush1.msra.mxu0 %v20
  %323 = vmatprep.subr.mxu0 0.0
  %324 = vmatpush2.msra.mxu0 0.0
  %325 = vmatprep.subr.mxu0 0.0
  %326 = vmatpush2.msra.mxu0 0.0
  %327 = vmatprep.subr.mxu0 0.0
  %328 = vmatpush2.msra.mxu0 0.0
  %329 = vmatprep.subr.mxu0 0.0
  %330 = vmatpush2.msra.mxu0 0.0
  %331 = vmatprep.subr.mxu0 0.0
  %332 = vmatpush2.msra.mxu0 0.0
  %333 = vmatprep.subr.mxu0 0.0
  %334 = vmatpush2.msra.mxu0 0.0
  %335 = vmatprep.subr.mxu0 0.0
  %336 = vmatpush2.msra.mxu0 0.0
  %337 = vmatprep.subr.mxu0 0.0
  %338 = vmatpush2.msra.mxu0 0.0
  %339 = vmatprep.subr.mxu0 0.0
  %340 = vmatpush2.msra.mxu0 0.0
  %341 = vmatprep.subr.mxu0 0.0
  %342 = vmatpush2.msra.mxu0 0.0
  %343 = vmatprep.subr.mxu0 0.0
  %344 = vmatpush2.msra.mxu0 0.0
  %345 = vmatprep.subr.mxu0 0.0
  %346 = vmatpush2.msra.mxu0 0.0
  %347 = vmatprep.subr.mxu0 0.0
  %348 = vmatpush2.msra.mxu0 0.0
  %349 = vmatprep.subr.mxu0 0.0
  %350 = vmatpush2.msra.mxu0 0.0
  %351 = vmatprep.subr.mxu0 0.0
  %352 = vmatpush2.msra.mxu0 0.0
  %353 = vmatprep.subr.mxu0 0.0
  %354 = vmatpush2.msra.mxu0 0.0
  %355 = vmatprep.mubr.f32.mxu0 0.0
  %356 = vmatmul.mubr.f32.gmra.mxu0 %v289
  %v357 = vpop.f32.mrf.mxu0
  %v358 = vadd.f32 0.0, %v357
  %v359 = vpop.f32.mrf.mxu0
  %360 = vdwg.mxu0
  %361 = vmatprep.subr.mxu0 0.0
  %362 = vmatpush1.msra.mxu0 0.0
  %363 = vmatprep.subr.mxu0 0.0
  %364 = vmatpush1.msra.mxu0 0.0
  %365 = vmatprep.subr.mxu0 0.0
  %366 = vmatpush1.msra.mxu0 0.0
  %367 = vmatprep.subr.mxu0 0.0
  %368 = vmatpush1.msra.mxu0 0.0
  %369 = vmatprep.subr.mxu0 0.0
  %370 = vmatpush1.msra.mxu0 0.0
  %371 = vmatprep.subr.mxu0 0.0
  %372 = vmatpush1.msra.mxu0 0.0
  %373 = vmatprep.subr.mxu0 0.0
  %374 = vmatpush1.msra.mxu0 0.0
  %375 = vmatprep.subr.mxu0 0.0
  %376 = vmatpush1.msra.mxu0 0.0
  %377 = vmatprep.subr.mxu0 0.0
  %378 = vmatpush1.msra.mxu0 0.0
  %379 = vmatprep.subr.mxu0 0.0
  %380 = vmatpush1.msra.mxu0 0.0
  %381 = vmatprep.subr.mxu0 0.0
  %382 = vmatpush1.msra.mxu0 0.0
  %383 = vmatprep.subr.mxu0 0.0
  %384 = vmatpush1.msra.mxu0 0.0
  %385 = vmatprep.subr.mxu0 0.0
  %386 = vmatpush1.msra.mxu0 %v28
  %387 = vmatprep.subr.mxu0 0.0
  %388 = vmatpush1.msra.mxu0 %v27
  %389 = vmatprep.subr.mxu0 0.0
  %390 = vmatpush1.msra.mxu0 %v26
  %391 = vmatprep.subr.mxu0 0.0
  %392 = vmatpush1.msra.mxu0 %v25
  %393 = vmatprep.subr.mxu0 0.0
  %394 = vmatpush2.msra.mxu0 0.0
  %395 = vmatprep.subr.mxu0 0.0
  %396 = vmatpush2.msra.mxu0 0.0
  %397 = vmatprep.subr.mxu0 0.0
  %398 = vmatpush2.msra.mxu0 0.0
  %399 = vmatprep.subr.mxu0 0.0
  %400 = vmatpush2.msra.mxu0 0.0
  %401 = vmatprep.subr.mxu0 0.0
  %402 = vmatpush2.msra.mxu0 0.0
  %403 = vmatprep.subr.mxu0 0.0
  %404 = vmatpush2.msra.mxu0 0.0
  %405 = vmatprep.subr.mxu0 0.0
  %406 = vmatpush2.msra.mxu0 0.0
  %407 = vmatprep.subr.mxu0 0.0
  %408 = vmatpush2.msra.mxu0 0.0
  %409 = vmatprep.subr.mxu0 0.0
  %410 = vmatpush2.msra.mxu0 0.0
  %411 = vmatprep.subr.mxu0 0.0
  %412 = vmatpush2.msra.mxu0 0.0
  %413 = vmatprep.subr.mxu0 0.0
  %414 = vmatpush2.msra.mxu0 0.0
  %415 = vmatprep.subr.mxu0 0.0
  %416 = vmatpush2.msra.mxu0 0.0
  %417 = vmatprep.subr.mxu0 0.0
  %418 = vmatpush2.msra.mxu0 0.0
  %419 = vmatprep.subr.mxu0 0.0
  %420 = vmatpush2.msra.mxu0 0.0
  %421 = vmatprep.subr.mxu0 0.0
  %422 = vmatpush2.msra.mxu0 0.0
  %423 = vmatprep.subr.mxu0 0.0
  %424 = vmatpush2.msra.mxu0 0.0
  %425 = vmatprep.mubr.f32.mxu0 0.0
  %426 = vmatmul.mubr.f32.gmra.mxu0 %v289
  %v427 = vpop.f32.mrf.mxu0
  %v428 = vadd.f32 0.0, %v427
  %v429 = vpop.f32.mrf.mxu0
  %430 = vdwg.mxu0
  %431 = vmatprep.subr.mxu0 0.0
  %432 = vmatpush1.msra.mxu0 0.0
  %433 = vmatprep.subr.mxu0 0.0
  %434 = vmatpush1.msra.mxu0 0.0
  %435 = vmatprep.subr.mxu0 0.0
  %436 = vmatpush1.msra.mxu0 0.0
  %437 = vmatprep.subr.mxu0 0.0
  %438 = vmatpush1.msra.mxu0 0.0
  %439 = vmatprep.subr.mxu0 0.0
  %440 = vmatpush1.msra.mxu0 0.0
  %441 = vmatprep.subr.mxu0 0.0
  %442 = vmatpush1.msra.mxu0 0.0
  %443 = vmatprep.subr.mxu0 0.0
  %444 = vmatpush1.msra.mxu0 0.0
  %445 = vmatprep.subr.mxu0 0.0
  %446 = vmatpush1.msra.mxu0 0.0
  %447 = vmatprep.subr.mxu0 0.0
  %448 = vmatpush1.msra.mxu0 0.0
  %449 = vmatprep.subr.mxu0 0.0
  %450 = vmatpush1.msra.mxu0 0.0
  %451 = vmatprep.subr.mxu0 0.0
  %452 = vmatpush1.msra.mxu0 0.0
  %453 = vmatprep.subr.mxu0 0.0
  %454 = vmatpush1.msra.mxu0 0.0
  %455 = vmatprep.subr.mxu0 0.0
  %456 = vmatpush1.msra.mxu0 %v33
  %457 = vmatprep.subr.mxu0 0.0
  %458 = vmatpush1.msra.mxu0 %v32
  %459 = vmatprep.subr.mxu0 0.0
  %460 = vmatpush1.msra.mxu0 %v31
  %461 = vmatprep.subr.mxu0 0.0
  %462 = vmatpush1.msra.mxu0 %v30
  %463 = vmatprep.subr.mxu0 0.0
  %464 = vmatpush2.msra.mxu0 0.0
  %465 = vmatprep.subr.mxu0 0.0
  %466 = vmatpush2.msra.mxu0 0.0
  %467 = vmatprep.subr.mxu0 0.0
  %468 = vmatpush2.msra.mxu0 0.0
  %469 = vmatprep.subr.mxu0 0.0
  %470 = vmatpush2.msra.mxu0 0.0
  %471 = vmatprep.subr.mxu0 0.0
  %472 = vmatpush2.msra.mxu0 0.0
  %473 = vmatprep.subr.mxu0 0.0
  %474 = vmatpush2.msra.mxu0 0.0
  %475 = vmatprep.subr.mxu0 0.0
  %476 = vmatpush2.msra.mxu0 0.0
  %477 = vmatprep.subr.mxu0 0.0
  %478 = vmatpush2.msra.mxu0 0.0
  %479 = vmatprep.subr.mxu0 0.0
  %480 = vmatpush2.msra.mxu0 0.0
  %481 = vmatprep.subr.mxu0 0.0
  %482 = vmatpush2.msra.mxu0 0.0
  %483 = vmatprep.subr.mxu0 0.0
  %484 = vmatpush2.msra.mxu0 0.0
  %485 = vmatprep.subr.mxu0 0.0
  %486 = vmatpush2.msra.mxu0 0.0
  %487 = vmatprep.subr.mxu0 0.0
  %488 = vmatpush2.msra.mxu0 0.0
  %489 = vmatprep.subr.mxu0 0.0
  %490 = vmatpush2.msra.mxu0 0.0
  %491 = vmatprep.subr.mxu0 0.0
  %492 = vmatpush2.msra.mxu0 0.0
  %493 = vmatprep.subr.mxu0 0.0
  %494 = vmatpush2.msra.mxu0 0.0
  %495 = vmatprep.mubr.f32.mxu0 0.0
  %496 = vmatmul.mubr.f32.gmra.mxu0 %v289
  %v497 = vpop.f32.mrf.mxu0
  %v498 = vadd.f32 %v187, %v497
  %v499 = vpop.f32.mrf.mxu0
  %500 = vdwg.mxu0
  %v501 = vadd.f32 %v284, %v358
  %v502 = vxor.u32 %v501, 2147483648
  %v503 = vmul.f32 %v502, 1.442695
  %v504 = vpow.pop %v503
  %v505 = vadd.f32 %v504, 1.0
  %v506 = vrcp.pop %v505
  %v507 = vmul.f32 1.0, %v506
  %v508 = vadd.f32 %v285, %v428
  %v509 = vxor.u32 %v508, 2147483648
  %v510 = vmul.f32 %v509, 1.442695
  %v511 = vpow.pop %v510
  %v512 = vadd.f32 %v511, 1.0
  %v513 = vrcp.pop %v512
  %v514 = vmul.f32 1.0, %v513
  %v515 = vmul.f32 %v507, %v498
  %v516 = vadd.f32 %v286, %v515
  %v517 = vtanh.pop %v516
  %v518 = vsub.f32 1.0, %v514
  %v519 = vmul.f32 %v518, %v517
  %v520 = vmul.f32 %v514, %v287
  %v521 = vadd.f32 %v519, %v520
  %522 = vst.msk [vmem:[#allocation2] sm:$0x3] %vm280, %v521
  %s523 = scalar_lea.vmem %s3, 2
  %524 = vst.msk [vmem:[%s523] sm:$0x3] %vm280, %v521
  %s525 = scalar_lea.vmem %s0, 12
  %v526 = vld [vmem:[%s525] sm:$0x3]
  %v527 = vld [vmem:[%s525 + $0x2] sm:$0x3]
  %v528 = vld [vmem:[%s525 + $0x4] sm:$0x3]
  %v529 = vld [vmem:[#allocation2] sm:$0x3]
  %v531 = vsel %vm39, %v529, 0
  %533 = vmatprep.subr.mxu0 0.0
  %534 = vmatpush1.msra.mxu0 0.0
  %535 = vmatprep.subr.mxu0 0.0
  %536 = vmatpush1.msra.mxu0 0.0
  %537 = vmatprep.subr.mxu0 0.0
  %538 = vmatpush1.msra.mxu0 0.0
  %539 = vmatprep.subr.mxu0 0.0
  %540 = vmatpush1.msra.mxu0 0.0
  %541 = vmatprep.subr.mxu0 0.0
  %542 = vmatpush1.msra.mxu0 0.0
  %543 = vmatprep.subr.mxu0 0.0
  %544 = vmatpush1.msra.mxu0 0.0
  %545 = vmatprep.subr.mxu0 0.0
  %546 = vmatpush1.msra.mxu0 0.0
  %547 = vmatprep.subr.mxu0 0.0
  %548 = vmatpush1.msra.mxu0 0.0
  %549 = vmatprep.subr.mxu0 0.0
  %550 = vmatpush1.msra.mxu0 0.0
  %551 = vmatprep.subr.mxu0 0.0
  %552 = vmatpush1.msra.mxu0 0.0
  %553 = vmatprep.subr.mxu0 0.0
  %554 = vmatpush1.msra.mxu0 0.0
  %555 = vmatprep.subr.mxu0 0.0
  %556 = vmatpush1.msra.mxu0 0.0
  %557 = vmatprep.subr.mxu0 0.0
  %558 = vmatpush1.msra.mxu0 %v23
  %559 = vmatprep.subr.mxu0 0.0
  %560 = vmatpush1.msra.mxu0 %v22
  %561 = vmatprep.subr.mxu0 0.0
  %562 = vmatpush1.msra.mxu0 %v21
  %563 = vmatprep.subr.mxu0 0.0
  %564 = vmatpush1.msra.mxu0 %v20
  %565 = vmatprep.subr.mxu0 0.0
  %566 = vmatpush2.msra.mxu0 0.0
  %567 = vmatprep.subr.mxu0 0.0
  %568 = vmatpush2.msra.mxu0 0.0
  %569 = vmatprep.subr.mxu0 0.0
  %570 = vmatpush2.msra.mxu0 0.0
  %571 = vmatprep.subr.mxu0 0.0
  %572 = vmatpush2.msra.mxu0 0.0
  %573 = vmatprep.subr.mxu0 0.0
  %574 = vmatpush2.msra.mxu0 0.0
  %575 = vmatprep.subr.mxu0 0.0
  %576 = vmatpush2.msra.mxu0 0.0
  %577 = vmatprep.subr.mxu0 0.0
  %578 = vmatpush2.msra.mxu0 0.0
  %579 = vmatprep.subr.mxu0 0.0
  %580 = vmatpush2.msra.mxu0 0.0
  %581 = vmatprep.subr.mxu0 0.0
  %582 = vmatpush2.msra.mxu0 0.0
  %583 = vmatprep.subr.mxu0 0.0
  %584 = vmatpush2.msra.mxu0 0.0
  %585 = vmatprep.subr.mxu0 0.0
  %586 = vmatpush2.msra.mxu0 0.0
  %587 = vmatprep.subr.mxu0 0.0
  %588 = vmatpush2.msra.mxu0 0.0
  %589 = vmatprep.subr.mxu0 0.0
  %590 = vmatpush2.msra.mxu0 0.0
  %591 = vmatprep.subr.mxu0 0.0
  %592 = vmatpush2.msra.mxu0 0.0
  %593 = vmatprep.subr.mxu0 0.0
  %594 = vmatpush2.msra.mxu0 0.0
  %595 = vmatprep.subr.mxu0 0.0
  %596 = vmatpush2.msra.mxu0 0.0
  %597 = vmatprep.mubr.f32.mxu0 0.0
  %598 = vmatmul.mubr.f32.gmra.mxu0 %v531
  %v599 = vpop.f32.mrf.mxu0
  %v600 = vadd.f32 0.0, %v599
  %v601 = vpop.f32.mrf.mxu0
  %602 = vdwg.mxu0
  %603 = vmatprep.subr.mxu0 0.0
  %604 = vmatpush1.msra.mxu0 0.0
  %605 = vmatprep.subr.mxu0 0.0
  %606 = vmatpush1.msra.mxu0 0.0
  %607 = vmatprep.subr.mxu0 0.0
  %608 = vmatpush1.msra.mxu0 0.0
  %609 = vmatprep.subr.mxu0 0.0
  %610 = vmatpush1.msra.mxu0 0.0
  %611 = vmatprep.subr.mxu0 0.0
  %612 = vmatpush1.msra.mxu0 0.0
  %613 = vmatprep.subr.mxu0 0.0
  %614 = vmatpush1.msra.mxu0 0.0
  %615 = vmatprep.subr.mxu0 0.0
  %616 = vmatpush1.msra.mxu0 0.0
  %617 = vmatprep.subr.mxu0 0.0
  %618 = vmatpush1.msra.mxu0 0.0
  %619 = vmatprep.subr.mxu0 0.0
  %620 = vmatpush1.msra.mxu0 0.0
  %621 = vmatprep.subr.mxu0 0.0
  %622 = vmatpush1.msra.mxu0 0.0
  %623 = vmatprep.subr.mxu0 0.0
  %624 = vmatpush1.msra.mxu0 0.0
  %625 = vmatprep.subr.mxu0 0.0
  %626 = vmatpush1.msra.mxu0 0.0
  %627 = vmatprep.subr.mxu0 0.0
  %628 = vmatpush1.msra.mxu0 %v28
  %629 = vmatprep.subr.mxu0 0.0
  %630 = vmatpush1.msra.mxu0 %v27
  %631 = vmatprep.subr.mxu0 0.0
  %632 = vmatpush1.msra.mxu0 %v26
  %633 = vmatprep.subr.mxu0 0.0
  %634 = vmatpush1.msra.mxu0 %v25
  %635 = vmatprep.subr.mxu0 0.0
  %636 = vmatpush2.msra.mxu0 0.0
  %637 = vmatprep.subr.mxu0 0.0
  %638 = vmatpush2.msra.mxu0 0.0
  %639 = vmatprep.subr.mxu0 0.0
  %640 = vmatpush2.msra.mxu0 0.0
  %641 = vmatprep.subr.mxu0 0.0
  %642 = vmatpush2.msra.mxu0 0.0
  %643 = vmatprep.subr.mxu0 0.0
  %644 = vmatpush2.msra.mxu0 0.0
  %645 = vmatprep.subr.mxu0 0.0
  %646 = vmatpush2.msra.mxu0 0.0
  %647 = vmatprep.subr.mxu0 0.0
  %648 = vmatpush2.msra.mxu0 0.0
  %649 = vmatprep.subr.mxu0 0.0
  %650 = vmatpush2.msra.mxu0 0.0
  %651 = vmatprep.subr.mxu0 0.0
  %652 = vmatpush2.msra.mxu0 0.0
  %653 = vmatprep.subr.mxu0 0.0
  %654 = vmatpush2.msra.mxu0 0.0
  %655 = vmatprep.subr.mxu0 0.0
  %656 = vmatpush2.msra.mxu0 0.0
  %657 = vmatprep.subr.mxu0 0.0
  %658 = vmatpush2.msra.mxu0 0.0
  %659 = vmatprep.subr.mxu0 0.0
  %660 = vmatpush2.msra.mxu0 0.0
  %661 = vmatprep.subr.mxu0 0.0
  %662 = vmatpush2.msra.mxu0 0.0
  %663 = vmatprep.subr.mxu0 0.0
  %664 = vmatpush2.msra.mxu0 0.0
  %665 = vmatprep.subr.mxu0 0.0
  %666 = vmatpush2.msra.mxu0 0.0
  %667 = vmatprep.mubr.f32.mxu0 0.0
  %668 = vmatmul.mubr.f32.gmra.mxu0 %v531
  %v669 = vpop.f32.mrf.mxu0
  %v670 = vadd.f32 0.0, %v669
  %v671 = vpop.f32.mrf.mxu0
  %672 = vdwg.mxu0
  %673 = vmatprep.subr.mxu0 0.0
  %674 = vmatpush1.msra.mxu0 0.0
  %675 = vmatprep.subr.mxu0 0.0
  %676 = vmatpush1.msra.mxu0 0.0
  %677 = vmatprep.subr.mxu0 0.0
  %678 = vmatpush1.msra.mxu0 0.0
  %679 = vmatprep.subr.mxu0 0.0
  %680 = vmatpush1.msra.mxu0 0.0
  %681 = vmatprep.subr.mxu0 0.0
  %682 = vmatpush1.msra.mxu0 0.0
  %683 = vmatprep.subr.mxu0 0.0
  %684 = vmatpush1.msra.mxu0 0.0
  %685 = vmatprep.subr.mxu0 0.0
  %686 = vmatpush1.msra.mxu0 0.0
  %687 = vmatprep.subr.mxu0 0.0
  %688 = vmatpush1.msra.mxu0 0.0
  %689 = vmatprep.subr.mxu0 0.0
  %690 = vmatpush1.msra.mxu0 0.0
  %691 = vmatprep.subr.mxu0 0.0
  %692 = vmatpush1.msra.mxu0 0.0
  %693 = vmatprep.subr.mxu0 0.0
  %694 = vmatpush1.msra.mxu0 0.0
  %695 = vmatprep.subr.mxu0 0.0
  %696 = vmatpush1.msra.mxu0 0.0
  %697 = vmatprep.subr.mxu0 0.0
  %698 = vmatpush1.msra.mxu0 %v33
  %699 = vmatprep.subr.mxu0 0.0
  %700 = vmatpush1.msra.mxu0 %v32
  %701 = vmatprep.subr.mxu0 0.0
  %702 = vmatpush1.msra.mxu0 %v31
  %703 = vmatprep.subr.mxu0 0.0
  %704 = vmatpush1.msra.mxu0 %v30
  %705 = vmatprep.subr.mxu0 0.0
  %706 = vmatpush2.msra.mxu0 0.0
  %707 = vmatprep.subr.mxu0 0.0
  %708 = vmatpush2.msra.mxu0 0.0
  %709 = vmatprep.subr.mxu0 0.0
  %710 = vmatpush2.msra.mxu0 0.0
  %711 = vmatprep.subr.mxu0 0.0
  %712 = vmatpush2.msra.mxu0 0.0
  %713 = vmatprep.subr.mxu0 0.0
  %714 = vmatpush2.msra.mxu0 0.0
  %715 = vmatprep.subr.mxu0 0.0
  %716 = vmatpush2.msra.mxu0 0.0
  %717 = vmatprep.subr.mxu0 0.0
  %718 = vmatpush2.msra.mxu0 0.0
  %719 = vmatprep.subr.mxu0 0.0
  %720 = vmatpush2.msra.mxu0 0.0
  %721 = vmatprep.subr.mxu0 0.0
  %722 = vmatpush2.msra.mxu0 0.0
  %723 = vmatprep.subr.mxu0 0.0
  %724 = vmatpush2.msra.mxu0 0.0
  %725 = vmatprep.subr.mxu0 0.0
  %726 = vmatpush2.msra.mxu0 0.0
  %727 = vmatprep.subr.mxu0 0.0
  %728 = vmatpush2.msra.mxu0 0.0
  %729 = vmatprep.subr.mxu0 0.0
  %730 = vmatpush2.msra.mxu0 0.0
  %731 = vmatprep.subr.mxu0 0.0
  %732 = vmatpush2.msra.mxu0 0.0
  %733 = vmatprep.subr.mxu0 0.0
  %734 = vmatpush2.msra.mxu0 0.0
  %735 = vmatprep.subr.mxu0 0.0
  %736 = vmatpush2.msra.mxu0 0.0
  %737 = vmatprep.mubr.f32.mxu0 0.0
  %738 = vmatmul.mubr.f32.gmra.mxu0 %v531
  %v739 = vpop.f32.mrf.mxu0
  %v740 = vadd.f32 %v187, %v739
  %v741 = vpop.f32.mrf.mxu0
  %742 = vdwg.mxu0
  %v743 = vadd.f32 %v526, %v600
  %v744 = vxor.u32 %v743, 2147483648
  %v745 = vmul.f32 %v744, 1.442695
  %v746 = vpow.pop %v745
  %v747 = vadd.f32 %v746, 1.0
  %v748 = vrcp.pop %v747
  %v749 = vmul.f32 1.0, %v748
  %v750 = vadd.f32 %v527, %v670
  %v751 = vxor.u32 %v750, 2147483648
  %v752 = vmul.f32 %v751, 1.442695
  %v753 = vpow.pop %v752
  %v754 = vadd.f32 %v753, 1.0
  %v755 = vrcp.pop %v754
  %v756 = vmul.f32 1.0, %v755
  %v757 = vmul.f32 %v749, %v740
  %v758 = vadd.f32 %v528, %v757
  %v759 = vtanh.pop %v758
  %v760 = vsub.f32 1.0, %v756
  %v761 = vmul.f32 %v760, %v759
  %v762 = vmul.f32 %v756, %v529
  %v763 = vadd.f32 %v761, %v762
  %764 = vst.msk [vmem:[#allocation2] sm:$0x3] %vm280, %v763
  %s765 = scalar_lea.vmem %s3, 4
  %766 = vst.msk [vmem:[%s765] sm:$0x3] %vm280, %v763
  %s767 = scalar_lea.vmem %s0, 18
  %v768 = vld [vmem:[%s767] sm:$0x3]
  %v769 = vld [vmem:[%s767 + $0x2] sm:$0x3]
  %v770 = vld [vmem:[%s767 + $0x4] sm:$0x3]
  %v771 = vld [vmem:[#allocation2] sm:$0x3]
  %v773 = vsel %vm39, %v771, 0
  %775 = vmatprep.subr.mxu0 0.0
  %776 = vmatpush1.msra.mxu0 0.0
  %777 = vmatprep.subr.mxu0 0.0
  %778 = vmatpush1.msra.mxu0 0.0
  %779 = vmatprep.subr.mxu0 0.0
  %780 = vmatpush1.msra.mxu0 0.0
  %781 = vmatprep.subr.mxu0 0.0
  %782 = vmatpush1.msra.mxu0 0.0
  %783 = vmatprep.subr.mxu0 0.0
  %784 = vmatpush1.msra.mxu0 0.0
  %785 = vmatprep.subr.mxu0 0.0
  %786 = vmatpush1.msra.mxu0 0.0
  %787 = vmatprep.subr.mxu0 0.0
  %788 = vmatpush1.msra.mxu0 0.0
  %789 = vmatprep.subr.mxu0 0.0
  %790 = vmatpush1.msra.mxu0 0.0
  %791 = vmatprep.subr.mxu0 0.0
  %792 = vmatpush1.msra.mxu0 0.0
  %793 = vmatprep.subr.mxu0 0.0
  %794 = vmatpush1.msra.mxu0 0.0
  %795 = vmatprep.subr.mxu0 0.0
  %796 = vmatpush1.msra.mxu0 0.0
  %797 = vmatprep.subr.mxu0 0.0
  %798 = vmatpush1.msra.mxu0 0.0
  %799 = vmatprep.subr.mxu0 0.0
  %800 = vmatpush1.msra.mxu0 %v23
  %801 = vmatprep.subr.mxu0 0.0
  %802 = vmatpush1.msra.mxu0 %v22
  %803 = vmatprep.subr.mxu0 0.0
  %804 = vmatpush1.msra.mxu0 %v21
  %805 = vmatprep.subr.mxu0 0.0
  %806 = vmatpush1.msra.mxu0 %v20
  %807 = vmatprep.subr.mxu0 0.0
  %808 = vmatpush2.msra.mxu0 0.0
  %809 = vmatprep.subr.mxu0 0.0
  %810 = vmatpush2.msra.mxu0 0.0
  %811 = vmatprep.subr.mxu0 0.0
  %812 = vmatpush2.msra.mxu0 0.0
  %813 = vmatprep.subr.mxu0 0.0
  %814 = vmatpush2.msra.mxu0 0.0
  %815 = vmatprep.subr.mxu0 0.0
  %816 = vmatpush2.msra.mxu0 0.0
  %817 = vmatprep.subr.mxu0 0.0
  %818 = vmatpush2.msra.mxu0 0.0
  %819 = vmatprep.subr.mxu0 0.0
  %820 = vmatpush2.msra.mxu0 0.0
  %821 = vmatprep.subr.mxu0 0.0
  %822 = vmatpush2.msra.mxu0 0.0
  %823 = vmatprep.subr.mxu0 0.0
  %824 = vmatpush2.msra.mxu0 0.0
  %825 = vmatprep.subr.mxu0 0.0
  %826 = vmatpush2.msra.mxu0 0.0
  %827 = vmatprep.subr.mxu0 0.0
  %828 = vmatpush2.msra.mxu0 0.0
  %829 = vmatprep.subr.mxu0 0.0
  %830 = vmatpush2.msra.mxu0 0.0
  %831 = vmatprep.subr.mxu0 0.0
  %832 = vmatpush2.msra.mxu0 0.0
  %833 = vmatprep.subr.mxu0 0.0
  %834 = vmatpush2.msra.mxu0 0.0
  %835 = vmatprep.subr.mxu0 0.0
  %836 = vmatpush2.msra.mxu0 0.0
  %837 = vmatprep.subr.mxu0 0.0
  %838 = vmatpush2.msra.mxu0 0.0
  %839 = vmatprep.mubr.f32.mxu0 0.0
  %840 = vmatmul.mubr.f32.gmra.mxu0 %v773
  %v841 = vpop.f32.mrf.mxu0
  %v842 = vadd.f32 0.0, %v841
  %v843 = vpop.f32.mrf.mxu0
  %844 = vdwg.mxu0
  %845 = vmatprep.subr.mxu0 0.0
  %846 = vmatpush1.msra.mxu0 0.0
  %847 = vmatprep.subr.mxu0 0.0
  %848 = vmatpush1.msra.mxu0 0.0
  %849 = vmatprep.subr.mxu0 0.0
  %850 = vmatpush1.msra.mxu0 0.0
  %851 = vmatprep.subr.mxu0 0.0
  %852 = vmatpush1.msra.mxu0 0.0
  %853 = vmatprep.subr.mxu0 0.0
  %854 = vmatpush1.msra.mxu0 0.0
  %855 = vmatprep.subr.mxu0 0.0
  %856 = vmatpush1.msra.mxu0 0.0
  %857 = vmatprep.subr.mxu0 0.0
  %858 = vmatpush1.msra.mxu0 0.0
  %859 = vmatprep.subr.mxu0 0.0
  %860 = vmatpush1.msra.mxu0 0.0
  %861 = vmatprep.subr.mxu0 0.0
  %862 = vmatpush1.msra.mxu0 0.0
  %863 = vmatprep.subr.mxu0 0.0
  %864 = vmatpush1.msra.mxu0 0.0
  %865 = vmatprep.subr.mxu0 0.0
  %866 = vmatpush1.msra.mxu0 0.0
  %867 = vmatprep.subr.mxu0 0.0
  %868 = vmatpush1.msra.mxu0 0.0
  %869 = vmatprep.subr.mxu0 0.0
  %870 = vmatpush1.msra.mxu0 %v28
  %871 = vmatprep.subr.mxu0 0.0
  %872 = vmatpush1.msra.mxu0 %v27
  %873 = vmatprep.subr.mxu0 0.0
  %874 = vmatpush1.msra.mxu0 %v26
  %875 = vmatprep.subr.mxu0 0.0
  %876 = vmatpush1.msra.mxu0 %v25
  %877 = vmatprep.subr.mxu0 0.0
  %878 = vmatpush2.msra.mxu0 0.0
  %879 = vmatprep.subr.mxu0 0.0
  %880 = vmatpush2.msra.mxu0 0.0
  %881 = vmatprep.subr.mxu0 0.0
  %882 = vmatpush2.msra.mxu0 0.0
  %883 = vmatprep.subr.mxu0 0.0
  %884 = vmatpush2.msra.mxu0 0.0
  %885 = vmatprep.subr.mxu0 0.0
  %886 = vmatpush2.msra.mxu0 0.0
  %887 = vmatprep.subr.mxu0 0.0
  %888 = vmatpush2.msra.mxu0 0.0
  %889 = vmatprep.subr.mxu0 0.0
  %890 = vmatpush2.msra.mxu0 0.0
  %891 = vmatprep.subr.mxu0 0.0
  %892 = vmatpush2.msra.mxu0 0.0
  %893 = vmatprep.subr.mxu0 0.0
  %894 = vmatpush2.msra.mxu0 0.0
  %895 = vmatprep.subr.mxu0 0.0
  %896 = vmatpush2.msra.mxu0 0.0
  %897 = vmatprep.subr.mxu0 0.0
  %898 = vmatpush2.msra.mxu0 0.0
  %899 = vmatprep.subr.mxu0 0.0
  %900 = vmatpush2.msra.mxu0 0.0
  %901 = vmatprep.subr.mxu0 0.0
  %902 = vmatpush2.msra.mxu0 0.0
  %903 = vmatprep.subr.mxu0 0.0
  %904 = vmatpush2.msra.mxu0 0.0
  %905 = vmatprep.subr.mxu0 0.0
  %906 = vmatpush2.msra.mxu0 0.0
  %907 = vmatprep.subr.mxu0 0.0
  %908 = vmatpush2.msra.mxu0 0.0
  %909 = vmatprep.mubr.f32.mxu0 0.0
  %910 = vmatmul.mubr.f32.gmra.mxu0 %v773
  %v911 = vpop.f32.mrf.mxu0
  %v912 = vadd.f32 0.0, %v911
  %v913 = vpop.f32.mrf.mxu0
  %914 = vdwg.mxu0
  %915 = vmatprep.subr.mxu0 0.0
  %916 = vmatpush1.msra.mxu0 0.0
  %917 = vmatprep.subr.mxu0 0.0
  %918 = vmatpush1.msra.mxu0 0.0
  %919 = vmatprep.subr.mxu0 0.0
  %920 = vmatpush1.msra.mxu0 0.0
  %921 = vmatprep.subr.mxu0 0.0
  %922 = vmatpush1.msra.mxu0 0.0
  %923 = vmatprep.subr.mxu0 0.0
  %924 = vmatpush1.msra.mxu0 0.0
  %925 = vmatprep.subr.mxu0 0.0
  %926 = vmatpush1.msra.mxu0 0.0
  %927 = vmatprep.subr.mxu0 0.0
  %928 = vmatpush1.msra.mxu0 0.0
  %929 = vmatprep.subr.mxu0 0.0
  %930 = vmatpush1.msra.mxu0 0.0
  %931 = vmatprep.subr.mxu0 0.0
  %932 = vmatpush1.msra.mxu0 0.0
  %933 = vmatprep.subr.mxu0 0.0
  %934 = vmatpush1.msra.mxu0 0.0
  %935 = vmatprep.subr.mxu0 0.0
  %936 = vmatpush1.msra.mxu0 0.0
  %937 = vmatprep.subr.mxu0 0.0
  %938 = vmatpush1.msra.mxu0 0.0
  %939 = vmatprep.subr.mxu0 0.0
  %940 = vmatpush1.msra.mxu0 %v33
  %941 = vmatprep.subr.mxu0 0.0
  %942 = vmatpush1.msra.mxu0 %v32
  %943 = vmatprep.subr.mxu0 0.0
  %944 = vmatpush1.msra.mxu0 %v31
  %945 = vmatprep.subr.mxu0 0.0
  %946 = vmatpush1.msra.mxu0 %v30
  %947 = vmatprep.subr.mxu0 0.0
  %948 = vmatpush2.msra.mxu0 0.0
  %949 = vmatprep.subr.mxu0 0.0
  %950 = vmatpush2.msra.mxu0 0.0
  %951 = vmatprep.subr.mxu0 0.0
  %952 = vmatpush2.msra.mxu0 0.0
  %953 = vmatprep.subr.mxu0 0.0
  %954 = vmatpush2.msra.mxu0 0.0
  %955 = vmatprep.subr.mxu0 0.0
  %956 = vmatpush2.msra.mxu0 0.0
  %957 = vmatprep.subr.mxu0 0.0
  %958 = vmatpush2.msra.mxu0 0.0
  %959 = vmatprep.subr.mxu0 0.0
  %960 = vmatpush2.msra.mxu0 0.0
  %961 = vmatprep.subr.mxu0 0.0
  %962 = vmatpush2.msra.mxu0 0.0
  %963 = vmatprep.subr.mxu0 0.0
  %964 = vmatpush2.msra.mxu0 0.0
  %965 = vmatprep.subr.mxu0 0.0
  %966 = vmatpush2.msra.mxu0 0.0
  %967 = vmatprep.subr.mxu0 0.0
  %968 = vmatpush2.msra.mxu0 0.0
  %969 = vmatprep.subr.mxu0 0.0
  %970 = vmatpush2.msra.mxu0 0.0
  %971 = vmatprep.subr.mxu0 0.0
  %972 = vmatpush2.msra.mxu0 0.0
  %973 = vmatprep.subr.mxu0 0.0
  %974 = vmatpush2.msra.mxu0 0.0
  %975 = vmatprep.subr.mxu0 0.0
  %976 = vmatpush2.msra.mxu0 0.0
  %977 = vmatprep.subr.mxu0 0.0
  %978 = vmatpush2.msra.mxu0 0.0
  %979 = vmatprep.mubr.f32.mxu0 0.0
  %980 = vmatmul.mubr.f32.gmra.mxu0 %v773
  %v981 = vpop.f32.mrf.mxu0
  %v982 = vadd.f32 %v187, %v981
  %v983 = vpop.f32.mrf.mxu0
  %984 = vdwg.mxu0
  %v985 = vadd.f32 %v768, %v842
  %v986 = vxor.u32 %v985, 2147483648
  %v987 = vmul.f32 %v986, 1.442695
  %v988 = vpow.pop %v987
  %v989 = vadd.f32 %v988, 1.0
  %v990 = vrcp.pop %v989
  %v991 = vmul.f32 1.0, %v990
  %v992 = vadd.f32 %v769, %v912
  %v993 = vxor.u32 %v992, 2147483648
  %v994 = vmul.f32 %v993, 1.442695
  %v995 = vpow.pop %v994
  %v996 = vadd.f32 %v995, 1.0
  %v997 = vrcp.pop %v996
  %v998 = vmul.f32 1.0, %v997
  %v999 = vmul.f32 %v991, %v982
  %v1000 = vadd.f32 %v770, %v999
  %v1001 = vtanh.pop %v1000
  %v1002 = vsub.f32 1.0, %v998
  %v1003 = vmul.f32 %v1002, %v1001
  %v1004 = vmul.f32 %v998, %v771
  %v1005 = vadd.f32 %v1003, %v1004
  %1006 = vst.msk [vmem:[#allocation2] sm:$0x3] %vm280, %v1005
  %s1007 = scalar_lea.vmem %s3, 6
  %1008 = vst.msk [vmem:[%s1007] sm:$0x3] %vm280, %v1005
  %s1009 = scalar_lea.vmem %s0, 24
  %v1010 = vld [vmem:[%s1009] sm:$0x3]
  %v1011 = vld [vmem:[%s1009 + $0x2] sm:$0x3]
  %v1012 = vld [vmem:[%s1009 + $0x4] sm:$0x3]
  %v1013 = vld [vmem:[#allocation2] sm:$0x3]
  %v1015 = vsel %vm39, %v1013, 0
  %1017 = vmatprep.subr.mxu0 0.0
  %1018 = vmatpush1.msra.mxu0 0.0
  %1019 = vmatprep.subr.mxu0 0.0
  %1020 = vmatpush1.msra.mxu0 0.0
  %1021 = vmatprep.subr.mxu0 0.0
  %1022 = vmatpush1.msra.mxu0 0.0
  %1023 = vmatprep.subr.mxu0 0.0
  %1024 = vmatpush1.msra.mxu0 0.0
  %1025 = vmatprep.subr.mxu0 0.0
  %1026 = vmatpush1.msra.mxu0 0.0
  %1027 = vmatprep.subr.mxu0 0.0
  %1028 = vmatpush1.msra.mxu0 0.0
  %1029 = vmatprep.subr.mxu0 0.0
  %1030 = vmatpush1.msra.mxu0 0.0
  %1031 = vmatprep.subr.mxu0 0.0
  %1032 = vmatpush1.msra.mxu0 0.0
  %1033 = vmatprep.subr.mxu0 0.0
  %1034 = vmatpush1.msra.mxu0 0.0
  %1035 = vmatprep.subr.mxu0 0.0
  %1036 = vmatpush1.msra.mxu0 0.0
  %1037 = vmatprep.subr.mxu0 0.0
  %1038 = vmatpush1.msra.mxu0 0.0
  %1039 = vmatprep.subr.mxu0 0.0
  %1040 = vmatpush1.msra.mxu0 0.0
  %1041 = vmatprep.subr.mxu0 0.0
  %1042 = vmatpush1.msra.mxu0 %v23
  %1043 = vmatprep.subr.mxu0 0.0
  %1044 = vmatpush1.msra.mxu0 %v22
  %1045 = vmatprep.subr.mxu0 0.0
  %1046 = vmatpush1.msra.mxu0 %v21
  %1047 = vmatprep.subr.mxu0 0.0
  %1048 = vmatpush1.msra.mxu0 %v20
  %1049 = vmatprep.subr.mxu0 0.0
  %1050 = vmatpush2.msra.mxu0 0.0
  %1051 = vmatprep.subr.mxu0 0.0
  %1052 = vmatpush2.msra.mxu0 0.0
  %1053 = vmatprep.subr.mxu0 0.0
  %1054 = vmatpush2.msra.mxu0 0.0
  %1055 = vmatprep.subr.mxu0 0.0
  %1056 = vmatpush2.msra.mxu0 0.0
  %1057 = vmatprep.subr.mxu0 0.0
  %1058 = vmatpush2.msra.mxu0 0.0
  %1059 = vmatprep.subr.mxu0 0.0
  %1060 = vmatpush2.msra.mxu0 0.0
  %1061 = vmatprep.subr.mxu0 0.0
  %1062 = vmatpush2.msra.mxu0 0.0
  %1063 = vmatprep.subr.mxu0 0.0
  %1064 = vmatpush2.msra.mxu0 0.0
  %1065 = vmatprep.subr.mxu0 0.0
  %1066 = vmatpush2.msra.mxu0 0.0
  %1067 = vmatprep.subr.mxu0 0.0
  %1068 = vmatpush2.msra.mxu0 0.0
  %1069 = vmatprep.subr.mxu0 0.0
  %1070 = vmatpush2.msra.mxu0 0.0
  %1071 = vmatprep.subr.mxu0 0.0
  %1072 = vmatpush2.msra.mxu0 0.0
  %1073 = vmatprep.subr.mxu0 0.0
  %1074 = vmatpush2.msra.mxu0 0.0
  %1075 = vmatprep.subr.mxu0 0.0
  %1076 = vmatpush2.msra.mxu0 0.0
  %1077 = vmatprep.subr.mxu0 0.0
  %1078 = vmatpush2.msra.mxu0 0.0
  %1079 = vmatprep.subr.mxu0 0.0
  %1080 = vmatpush2.msra.mxu0 0.0
  %1081 = vmatprep.mubr.f32.mxu0 0.0
  %1082 = vmatmul.mubr.f32.gmra.mxu0 %v1015
  %v1083 = vpop.f32.mrf.mxu0
  %v1084 = vadd.f32 0.0, %v1083
  %v1085 = vpop.f32.mrf.mxu0
  %1086 = vdwg.mxu0
  %1087 = vmatprep.subr.mxu0 0.0
  %1088 = vmatpush1.msra.mxu0 0.0
  %1089 = vmatprep.subr.mxu0 0.0
  %1090 = vmatpush1.msra.mxu0 0.0
  %1091 = vmatprep.subr.mxu0 0.0
  %1092 = vmatpush1.msra.mxu0 0.0
  %1093 = vmatprep.subr.mxu0 0.0
  %1094 = vmatpush1.msra.mxu0 0.0
  %1095 = vmatprep.subr.mxu0 0.0
  %1096 = vmatpush1.msra.mxu0 0.0
  %1097 = vmatprep.subr.mxu0 0.0
  %1098 = vmatpush1.msra.mxu0 0.0
  %1099 = vmatprep.subr.mxu0 0.0
  %1100 = vmatpush1.msra.mxu0 0.0
  %1101 = vmatprep.subr.mxu0 0.0
  %1102 = vmatpush1.msra.mxu0 0.0
  %1103 = vmatprep.subr.mxu0 0.0
  %1104 = vmatpush1.msra.mxu0 0.0
  %1105 = vmatprep.subr.mxu0 0.0
  %1106 = vmatpush1.msra.mxu0 0.0
  %1107 = vmatprep.subr.mxu0 0.0
  %1108 = vmatpush1.msra.mxu0 0.0
  %1109 = vmatprep.subr.mxu0 0.0
  %1110 = vmatpush1.msra.mxu0 0.0
  %1111 = vmatprep.subr.mxu0 0.0
  %1112 = vmatpush1.msra.mxu0 %v28
  %1113 = vmatprep.subr.mxu0 0.0
  %1114 = vmatpush1.msra.mxu0 %v27
  %1115 = vmatprep.subr.mxu0 0.0
  %1116 = vmatpush1.msra.mxu0 %v26
  %1117 = vmatprep.subr.mxu0 0.0
  %1118 = vmatpush1.msra.mxu0 %v25
  %1119 = vmatprep.subr.mxu0 0.0
  %1120 = vmatpush2.msra.mxu0 0.0
  %1121 = vmatprep.subr.mxu0 0.0
  %1122 = vmatpush2.msra.mxu0 0.0
  %1123 = vmatprep.subr.mxu0 0.0
  %1124 = vmatpush2.msra.mxu0 0.0
  %1125 = vmatprep.subr.mxu0 0.0
  %1126 = vmatpush2.msra.mxu0 0.0
  %1127 = vmatprep.subr.mxu0 0.0
  %1128 = vmatpush2.msra.mxu0 0.0
  %1129 = vmatprep.subr.mxu0 0.0
  %1130 = vmatpush2.msra.mxu0 0.0
  %1131 = vmatprep.subr.mxu0 0.0
  %1132 = vmatpush2.msra.mxu0 0.0
  %1133 = vmatprep.subr.mxu0 0.0
  %1134 = vmatpush2.msra.mxu0 0.0
  %1135 = vmatprep.subr.mxu0 0.0
  %1136 = vmatpush2.msra.mxu0 0.0
  %1137 = vmatprep.subr.mxu0 0.0
  %1138 = vmatpush2.msra.mxu0 0.0
  %1139 = vmatprep.subr.mxu0 0.0
  %1140 = vmatpush2.msra.mxu0 0.0
  %1141 = vmatprep.subr.mxu0 0.0
  %1142 = vmatpush2.msra.mxu0 0.0
  %1143 = vmatprep.subr.mxu0 0.0
  %1144 = vmatpush2.msra.mxu0 0.0
  %1145 = vmatprep.subr.mxu0 0.0
  %1146 = vmatpush2.msra.mxu0 0.0
  %1147 = vmatprep.subr.mxu0 0.0
  %1148 = vmatpush2.msra.mxu0 0.0
  %1149 = vmatprep.subr.mxu0 0.0
  %1150 = vmatpush2.msra.mxu0 0.0
  %1151 = vmatprep.mubr.f32.mxu0 0.0
  %1152 = vmatmul.mubr.f32.gmra.mxu0 %v1015
  %v1153 = vpop.f32.mrf.mxu0
  %v1154 = vadd.f32 0.0, %v1153
  %v1155 = vpop.f32.mrf.mxu0
  %1156 = vdwg.mxu0
  %1157 = vmatprep.subr.mxu0 0.0
  %1158 = vmatpush1.msra.mxu0 0.0
  %1159 = vmatprep.subr.mxu0 0.0
  %1160 = vmatpush1.msra.mxu0 0.0
  %1161 = vmatprep.subr.mxu0 0.0
  %1162 = vmatpush1.msra.mxu0 0.0
  %1163 = vmatprep.subr.mxu0 0.0
  %1164 = vmatpush1.msra.mxu0 0.0
  %1165 = vmatprep.subr.mxu0 0.0
  %1166 = vmatpush1.msra.mxu0 0.0
  %1167 = vmatprep.subr.mxu0 0.0
  %1168 = vmatpush1.msra.mxu0 0.0
  %1169 = vmatprep.subr.mxu0 0.0
  %1170 = vmatpush1.msra.mxu0 0.0
  %1171 = vmatprep.subr.mxu0 0.0
  %1172 = vmatpush1.msra.mxu0 0.0
  %1173 = vmatprep.subr.mxu0 0.0
  %1174 = vmatpush1.msra.mxu0 0.0
  %1175 = vmatprep.subr.mxu0 0.0
  %1176 = vmatpush1.msra.mxu0 0.0
  %1177 = vmatprep.subr.mxu0 0.0
  %1178 = vmatpush1.msra.mxu0 0.0
  %1179 = vmatprep.subr.mxu0 0.0
  %1180 = vmatpush1.msra.mxu0 0.0
  %1181 = vmatprep.subr.mxu0 0.0
  %1182 = vmatpush1.msra.mxu0 %v33
  %1183 = vmatprep.subr.mxu0 0.0
  %1184 = vmatpush1.msra.mxu0 %v32
  %1185 = vmatprep.subr.mxu0 0.0
  %1186 = vmatpush1.msra.mxu0 %v31
  %1187 = vmatprep.subr.mxu0 0.0
  %1188 = vmatpush1.msra.mxu0 %v30
  %1189 = vmatprep.subr.mxu0 0.0
  %1190 = vmatpush2.msra.mxu0 0.0
  %1191 = vmatprep.subr.mxu0 0.0
  %1192 = vmatpush2.msra.mxu0 0.0
  %1193 = vmatprep.subr.mxu0 0.0
  %1194 = vmatpush2.msra.mxu0 0.0
  %1195 = vmatprep.subr.mxu0 0.0
  %1196 = vmatpush2.msra.mxu0 0.0
  %1197 = vmatprep.subr.mxu0 0.0
  %1198 = vmatpush2.msra.mxu0 0.0
  %1199 = vmatprep.subr.mxu0 0.0
  %1200 = vmatpush2.msra.mxu0 0.0
  %1201 = vmatprep.subr.mxu0 0.0
  %1202 = vmatpush2.msra.mxu0 0.0
  %1203 = vmatprep.subr.mxu0 0.0
  %1204 = vmatpush2.msra.mxu0 0.0
  %1205 = vmatprep.subr.mxu0 0.0
  %1206 = vmatpush2.msra.mxu0 0.0
  %1207 = vmatprep.subr.mxu0 0.0
  %1208 = vmatpush2.msra.mxu0 0.0
  %1209 = vmatprep.subr.mxu0 0.0
  %1210 = vmatpush2.msra.mxu0 0.0
  %1211 = vmatprep.subr.mxu0 0.0
  %1212 = vmatpush2.msra.mxu0 0.0
  %1213 = vmatprep.subr.mxu0 0.0
  %1214 = vmatpush2.msra.mxu0 0.0
  %1215 = vmatprep.subr.mxu0 0.0
  %1216 = vmatpush2.msra.mxu0 0.0
  %1217 = vmatprep.subr.mxu0 0.0
  %1218 = vmatpush2.msra.mxu0 0.0
  %1219 = vmatprep.subr.mxu0 0.0
  %1220 = vmatpush2.msra.mxu0 0.0
  %1221 = vmatprep.mubr.f32.mxu0 0.0
  %1222 = vmatmul.mubr.f32.gmra.mxu0 %v1015
  %v1223 = vpop.f32.mrf.mxu0
  %v1224 = vadd.f32 %v187, %v1223
  %v1225 = vpop.f32.mrf.mxu0
  %1226 = vdwg.mxu0
  %v1227 = vadd.f32 %v1010, %v1084
  %v1228 = vxor.u32 %v1227, 2147483648
  %v1229 = vmul.f32 %v1228, 1.442695
  %v1230 = vpow.pop %v1229
  %v1231 = vadd.f32 %v1230, 1.0
  %v1232 = vrcp.pop %v1231
  %v1233 = vmul.f32 1.0, %v1232
  %v1234 = vadd.f32 %v1011, %v1154
  %v1235 = vxor.u32 %v1234, 2147483648
  %v1236 = vmul.f32 %v1235, 1.442695
  %v1237 = vpow.pop %v1236
  %v1238 = vadd.f32 %v1237, 1.0
  %v1239 = vrcp.pop %v1238
  %v1240 = vmul.f32 1.0, %v1239
  %v1241 = vmul.f32 %v1233, %v1224
  %v1242 = vadd.f32 %v1012, %v1241
  %v1243 = vtanh.pop %v1242
  %v1244 = vsub.f32 1.0, %v1240
  %v1245 = vmul.f32 %v1244, %v1243
  %v1246 = vmul.f32 %v1240, %v1013
  %v1247 = vadd.f32 %v1245, %v1246
  %1248 = vst.msk [vmem:[#allocation2] sm:$0x3] %vm280, %v1247
  %s1249 = scalar_lea.vmem %s3, 8
  %1250 = vst.msk [vmem:[%s1249] sm:$0x3] %vm280, %v1247
  %s1251 = scalar_lea.vmem %s0, 30
  %v1252 = vld [vmem:[%s1251] sm:$0x3]
  %v1253 = vld [vmem:[%s1251 + $0x2] sm:$0x3]
  %v1254 = vld [vmem:[%s1251 + $0x4] sm:$0x3]
  %v1255 = vld [vmem:[#allocation2] sm:$0x3]
  %v1257 = vsel %vm39, %v1255, 0
  %1259 = vmatprep.subr.mxu0 0.0
  %1260 = vmatpush1.msra.mxu0 0.0
  %1261 = vmatprep.subr.mxu0 0.0
  %1262 = vmatpush1.msra.mxu0 0.0
  %1263 = vmatprep.subr.mxu0 0.0
  %1264 = vmatpush1.msra.mxu0 0.0
  %1265 = vmatprep.subr.mxu0 0.0
  %1266 = vmatpush1.msra.mxu0 0.0
  %1267 = vmatprep.subr.mxu0 0.0
  %1268 = vmatpush1.msra.mxu0 0.0
  %1269 = vmatprep.subr.mxu0 0.0
  %1270 = vmatpush1.msra.mxu0 0.0
  %1271 = vmatprep.subr.mxu0 0.0
  %1272 = vmatpush1.msra.mxu0 0.0
  %1273 = vmatprep.subr.mxu0 0.0
  %1274 = vmatpush1.msra.mxu0 0.0
  %1275 = vmatprep.subr.mxu0 0.0
  %1276 = vmatpush1.msra.mxu0 0.0
  %1277 = vmatprep.subr.mxu0 0.0
  %1278 = vmatpush1.msra.mxu0 0.0
  %1279 = vmatprep.subr.mxu0 0.0
  %1280 = vmatpush1.msra.mxu0 0.0
  %1281 = vmatprep.subr.mxu0 0.0
  %1282 = vmatpush1.msra.mxu0 0.0
  %1283 = vmatprep.subr.mxu0 0.0
  %1284 = vmatpush1.msra.mxu0 %v23
  %1285 = vmatprep.subr.mxu0 0.0
  %1286 = vmatpush1.msra.mxu0 %v22
  %1287 = vmatprep.subr.mxu0 0.0
  %1288 = vmatpush1.msra.mxu0 %v21
  %1289 = vmatprep.subr.mxu0 0.0
  %1290 = vmatpush1.msra.mxu0 %v20
  %1291 = vmatprep.subr.mxu0 0.0
  %1292 = vmatpush2.msra.mxu0 0.0
  %1293 = vmatprep.subr.mxu0 0.0
  %1294 = vmatpush2.msra.mxu0 0.0
  %1295 = vmatprep.subr.mxu0 0.0
  %1296 = vmatpush2.msra.mxu0 0.0
  %1297 = vmatprep.subr.mxu0 0.0
  %1298 = vmatpush2.msra.mxu0 0.0
  %1299 = vmatprep.subr.mxu0 0.0
  %1300 = vmatpush2.msra.mxu0 0.0
  %1301 = vmatprep.subr.mxu0 0.0
  %1302 = vmatpush2.msra.mxu0 0.0
  %1303 = vmatprep.subr.mxu0 0.0
  %1304 = vmatpush2.msra.mxu0 0.0
  %1305 = vmatprep.subr.mxu0 0.0
  %1306 = vmatpush2.msra.mxu0 0.0
  %1307 = vmatprep.subr.mxu0 0.0
  %1308 = vmatpush2.msra.mxu0 0.0
  %1309 = vmatprep.subr.mxu0 0.0
  %1310 = vmatpush2.msra.mxu0 0.0
  %1311 = vmatprep.subr.mxu0 0.0
  %1312 = vmatpush2.msra.mxu0 0.0
  %1313 = vmatprep.subr.mxu0 0.0
  %1314 = vmatpush2.msra.mxu0 0.0
  %1315 = vmatprep.subr.mxu0 0.0
  %1316 = vmatpush2.msra.mxu0 0.0
  %1317 = vmatprep.subr.mxu0 0.0
  %1318 = vmatpush2.msra.mxu0 0.0
  %1319 = vmatprep.subr.mxu0 0.0
  %1320 = vmatpush2.msra.mxu0 0.0
  %1321 = vmatprep.subr.mxu0 0.0
  %1322 = vmatpush2.msra.mxu0 0.0
  %1323 = vmatprep.mubr.f32.mxu0 0.0
  %1324 = vmatmul.mubr.f32.gmra.mxu0 %v1257
  %v1325 = vpop.f32.mrf.mxu0
  %v1326 = vadd.f32 0.0, %v1325
  %v1327 = vpop.f32.mrf.mxu0
  %1328 = vdwg.mxu0
  %1329 = vmatprep.subr.mxu0 0.0
  %1330 = vmatpush1.msra.mxu0 0.0
  %1331 = vmatprep.subr.mxu0 0.0
  %1332 = vmatpush1.msra.mxu0 0.0
  %1333 = vmatprep.subr.mxu0 0.0
  %1334 = vmatpush1.msra.mxu0 0.0
  %1335 = vmatprep.subr.mxu0 0.0
  %1336 = vmatpush1.msra.mxu0 0.0
  %1337 = vmatprep.subr.mxu0 0.0
  %1338 = vmatpush1.msra.mxu0 0.0
  %1339 = vmatprep.subr.mxu0 0.0
  %1340 = vmatpush1.msra.mxu0 0.0
  %1341 = vmatprep.subr.mxu0 0.0
  %1342 = vmatpush1.msra.mxu0 0.0
  %1343 = vmatprep.subr.mxu0 0.0
  %1344 = vmatpush1.msra.mxu0 0.0
  %1345 = vmatprep.subr.mxu0 0.0
  %1346 = vmatpush1.msra.mxu0 0.0
  %1347 = vmatprep.subr.mxu0 0.0
  %1348 = vmatpush1.msra.mxu0 0.0
  %1349 = vmatprep.subr.mxu0 0.0
  %1350 = vmatpush1.msra.mxu0 0.0
  %1351 = vmatprep.subr.mxu0 0.0
  %1352 = vmatpush1.msra.mxu0 0.0
  %1353 = vmatprep.subr.mxu0 0.0
  %1354 = vmatpush1.msra.mxu0 %v28
  %1355 = vmatprep.subr.mxu0 0.0
  %1356 = vmatpush1.msra.mxu0 %v27
  %1357 = vmatprep.subr.mxu0 0.0
  %1358 = vmatpush1.msra.mxu0 %v26
  %1359 = vmatprep.subr.mxu0 0.0
  %1360 = vmatpush1.msra.mxu0 %v25
  %1361 = vmatprep.subr.mxu0 0.0
  %1362 = vmatpush2.msra.mxu0 0.0
  %1363 = vmatprep.subr.mxu0 0.0
  %1364 = vmatpush2.msra.mxu0 0.0
  %1365 = vmatprep.subr.mxu0 0.0
  %1366 = vmatpush2.msra.mxu0 0.0
  %1367 = vmatprep.subr.mxu0 0.0
  %1368 = vmatpush2.msra.mxu0 0.0
  %1369 = vmatprep.subr.mxu0 0.0
  %1370 = vmatpush2.msra.mxu0 0.0
  %1371 = vmatprep.subr.mxu0 0.0
  %1372 = vmatpush2.msra.mxu0 0.0
  %1373 = vmatprep.subr.mxu0 0.0
  %1374 = vmatpush2.msra.mxu0 0.0
  %1375 = vmatprep.subr.mxu0 0.0
  %1376 = vmatpush2.msra.mxu0 0.0
  %1377 = vmatprep.subr.mxu0 0.0
  %1378 = vmatpush2.msra.mxu0 0.0
  %1379 = vmatprep.subr.mxu0 0.0
  %1380 = vmatpush2.msra.mxu0 0.0
  %1381 = vmatprep.subr.mxu0 0.0
  %1382 = vmatpush2.msra.mxu0 0.0
  %1383 = vmatprep.subr.mxu0 0.0
  %1384 = vmatpush2.msra.mxu0 0.0
  %1385 = vmatprep.subr.mxu0 0.0
  %1386 = vmatpush2.msra.mxu0 0.0
  %1387 = vmatprep.subr.mxu0 0.0
  %1388 = vmatpush2.msra.mxu0 0.0
  %1389 = vmatprep.subr.mxu0 0.0
  %1390 = vmatpush2.msra.mxu0 0.0
  %1391 = vmatprep.subr.mxu0 0.0
  %1392 = vmatpush2.msra.mxu0 0.0
  %1393 = vmatprep.mubr.f32.mxu0 0.0
  %1394 = vmatmul.mubr.f32.gmra.mxu0 %v1257
  %v1395 = vpop.f32.mrf.mxu0
  %v1396 = vadd.f32 0.0, %v1395
  %v1397 = vpop.f32.mrf.mxu0
  %1398 = vdwg.mxu0
  %1399 = vmatprep.subr.mxu0 0.0
  %1400 = vmatpush1.msra.mxu0 0.0
  %1401 = vmatprep.subr.mxu0 0.0
  %1402 = vmatpush1.msra.mxu0 0.0
  %1403 = vmatprep.subr.mxu0 0.0
  %1404 = vmatpush1.msra.mxu0 0.0
  %1405 = vmatprep.subr.mxu0 0.0
  %1406 = vmatpush1.msra.mxu0 0.0
  %1407 = vmatprep.subr.mxu0 0.0
  %1408 = vmatpush1.msra.mxu0 0.0
  %1409 = vmatprep.subr.mxu0 0.0
  %1410 = vmatpush1.msra.mxu0 0.0
  %1411 = vmatprep.subr.mxu0 0.0
  %1412 = vmatpush1.msra.mxu0 0.0
  %1413 = vmatprep.subr.mxu0 0.0
  %1414 = vmatpush1.msra.mxu0 0.0
  %1415 = vmatprep.subr.mxu0 0.0
  %1416 = vmatpush1.msra.mxu0 0.0
  %1417 = vmatprep.subr.mxu0 0.0
  %1418 = vmatpush1.msra.mxu0 0.0
  %1419 = vmatprep.subr.mxu0 0.0
  %1420 = vmatpush1.msra.mxu0 0.0
  %1421 = vmatprep.subr.mxu0 0.0
  %1422 = vmatpush1.msra.mxu0 0.0
  %1423 = vmatprep.subr.mxu0 0.0
  %1424 = vmatpush1.msra.mxu0 %v33
  %1425 = vmatprep.subr.mxu0 0.0
  %1426 = vmatpush1.msra.mxu0 %v32
  %1427 = vmatprep.subr.mxu0 0.0
  %1428 = vmatpush1.msra.mxu0 %v31
  %1429 = vmatprep.subr.mxu0 0.0
  %1430 = vmatpush1.msra.mxu0 %v30
  %1431 = vmatprep.subr.mxu0 0.0
  %1432 = vmatpush2.msra.mxu0 0.0
  %1433 = vmatprep.subr.mxu0 0.0
  %1434 = vmatpush2.msra.mxu0 0.0
  %1435 = vmatprep.subr.mxu0 0.0
  %1436 = vmatpush2.msra.mxu0 0.0
  %1437 = vmatprep.subr.mxu0 0.0
  %1438 = vmatpush2.msra.mxu0 0.0
  %1439 = vmatprep.subr.mxu0 0.0
  %1440 = vmatpush2.msra.mxu0 0.0
  %1441 = vmatprep.subr.mxu0 0.0
  %1442 = vmatpush2.msra.mxu0 0.0
  %1443 = vmatprep.subr.mxu0 0.0
  %1444 = vmatpush2.msra.mxu0 0.0
  %1445 = vmatprep.subr.mxu0 0.0
  %1446 = vmatpush2.msra.mxu0 0.0
  %1447 = vmatprep.subr.mxu0 0.0
  %1448 = vmatpush2.msra.mxu0 0.0
  %1449 = vmatprep.subr.mxu0 0.0
  %1450 = vmatpush2.msra.mxu0 0.0
  %1451 = vmatprep.subr.mxu0 0.0
  %1452 = vmatpush2.msra.mxu0 0.0
  %1453 = vmatprep.subr.mxu0 0.0
  %1454 = vmatpush2.msra.mxu0 0.0
  %1455 = vmatprep.subr.mxu0 0.0
  %1456 = vmatpush2.msra.mxu0 0.0
  %1457 = vmatprep.subr.mxu0 0.0
  %1458 = vmatpush2.msra.mxu0 0.0
  %1459 = vmatprep.subr.mxu0 0.0
  %1460 = vmatpush2.msra.mxu0 0.0
  %1461 = vmatprep.subr.mxu0 0.0
  %1462 = vmatpush2.msra.mxu0 0.0
  %1463 = vmatprep.mubr.f32.mxu0 0.0
  %1464 = vmatmul.mubr.f32.gmra.mxu0 %v1257
  %v1465 = vpop.f32.mrf.mxu0
  %v1466 = vadd.f32 %v187, %v1465
  %v1467 = vpop.f32.mrf.mxu0
  %1468 = vdwg.mxu0
  %v1469 = vadd.f32 %v1252, %v1326
  %v1470 = vxor.u32 %v1469, 2147483648
  %v1471 = vmul.f32 %v1470, 1.442695
  %v1472 = vpow.pop %v1471
  %v1473 = vadd.f32 %v1472, 1.0
  %v1474 = vrcp.pop %v1473
  %v1475 = vmul.f32 1.0, %v1474
  %v1476 = vadd.f32 %v1253, %v1396
  %v1477 = vxor.u32 %v1476, 2147483648
  %v1478 = vmul.f32 %v1477, 1.442695
  %v1479 = vpow.pop %v1478
  %v1480 = vadd.f32 %v1479, 1.0
  %v1481 = vrcp.pop %v1480
  %v1482 = vmul.f32 1.0, %v1481
  %v1483 = vmul.f32 %v1475, %v1466
  %v1484 = vadd.f32 %v1254, %v1483
  %v1485 = vtanh.pop %v1484
  %v1486 = vsub.f32 1.0, %v1482
  %v1487 = vmul.f32 %v1486, %v1485
  %v1488 = vmul.f32 %v1482, %v1255
  %v1489 = vadd.f32 %v1487, %v1488
  %1490 = vst.msk [vmem:[#allocation2] sm:$0x3] %vm280, %v1489
  %s1491 = scalar_lea.vmem %s3, 10
  %1492 = vst.msk [vmem:[%s1491] sm:$0x3] %vm280, %v1489
  %s1493 = scalar_lea.vmem %s0, 36
  %v1494 = vld [vmem:[%s1493] sm:$0x3]
  %v1495 = vld [vmem:[%s1493 + $0x2] sm:$0x3]
  %v1496 = vld [vmem:[%s1493 + $0x4] sm:$0x3]
  %v1497 = vld [vmem:[#allocation2] sm:$0x3]
  %v1499 = vsel %vm39, %v1497, 0
  %1501 = vmatprep.subr.mxu0 0.0
  %1502 = vmatpush1.msra.mxu0 0.0
  %1503 = vmatprep.subr.mxu0 0.0
  %1504 = vmatpush1.msra.mxu0 0.0
  %1505 = vmatprep.subr.mxu0 0.0
  %1506 = vmatpush1.msra.mxu0 0.0
  %1507 = vmatprep.subr.mxu0 0.0
  %1508 = vmatpush1.msra.mxu0 0.0
  %1509 = vmatprep.subr.mxu0 0.0
  %1510 = vmatpush1.msra.mxu0 0.0
  %1511 = vmatprep.subr.mxu0 0.0
  %1512 = vmatpush1.msra.mxu0 0.0
  %1513 = vmatprep.subr.mxu0 0.0
  %1514 = vmatpush1.msra.mxu0 0.0
  %1515 = vmatprep.subr.mxu0 0.0
  %1516 = vmatpush1.msra.mxu0 0.0
  %1517 = vmatprep.subr.mxu0 0.0
  %1518 = vmatpush1.msra.mxu0 0.0
  %1519 = vmatprep.subr.mxu0 0.0
  %1520 = vmatpush1.msra.mxu0 0.0
  %1521 = vmatprep.subr.mxu0 0.0
  %1522 = vmatpush1.msra.mxu0 0.0
  %1523 = vmatprep.subr.mxu0 0.0
  %1524 = vmatpush1.msra.mxu0 0.0
  %1525 = vmatprep.subr.mxu0 0.0
  %1526 = vmatpush1.msra.mxu0 %v23
  %1527 = vmatprep.subr.mxu0 0.0
  %1528 = vmatpush1.msra.mxu0 %v22
  %1529 = vmatprep.subr.mxu0 0.0
  %1530 = vmatpush1.msra.mxu0 %v21
  %1531 = vmatprep.subr.mxu0 0.0
  %1532 = vmatpush1.msra.mxu0 %v20
  %1533 = vmatprep.subr.mxu0 0.0
  %1534 = vmatpush2.msra.mxu0 0.0
  %1535 = vmatprep.subr.mxu0 0.0
  %1536 = vmatpush2.msra.mxu0 0.0
  %1537 = vmatprep.subr.mxu0 0.0
  %1538 = vmatpush2.msra.mxu0 0.0
  %1539 = vmatprep.subr.mxu0 0.0
  %1540 = vmatpush2.msra.mxu0 0.0
  %1541 = vmatprep.subr.mxu0 0.0
  %1542 = vmatpush2.msra.mxu0 0.0
  %1543 = vmatprep.subr.mxu0 0.0
  %1544 = vmatpush2.msra.mxu0 0.0
  %1545 = vmatprep.subr.mxu0 0.0
  %1546 = vmatpush2.msra.mxu0 0.0
  %1547 = vmatprep.subr.mxu0 0.0
  %1548 = vmatpush2.msra.mxu0 0.0
  %1549 = vmatprep.subr.mxu0 0.0
  %1550 = vmatpush2.msra.mxu0 0.0
  %1551 = vmatprep.subr.mxu0 0.0
  %1552 = vmatpush2.msra.mxu0 0.0
  %1553 = vmatprep.subr.mxu0 0.0
  %1554 = vmatpush2.msra.mxu0 0.0
  %1555 = vmatprep.subr.mxu0 0.0
  %1556 = vmatpush2.msra.mxu0 0.0
  %1557 = vmatprep.subr.mxu0 0.0
  %1558 = vmatpush2.msra.mxu0 0.0
  %1559 = vmatprep.subr.mxu0 0.0
  %1560 = vmatpush2.msra.mxu0 0.0
  %1561 = vmatprep.subr.mxu0 0.0
  %1562 = vmatpush2.msra.mxu0 0.0
  %1563 = vmatprep.subr.mxu0 0.0
  %1564 = vmatpush2.msra.mxu0 0.0
  %1565 = vmatprep.mubr.f32.mxu0 0.0
  %1566 = vmatmul.mubr.f32.gmra.mxu0 %v1499
  %v1567 = vpop.f32.mrf.mxu0
  %v1568 = vadd.f32 0.0, %v1567
  %v1569 = vpop.f32.mrf.mxu0
  %1570 = vdwg.mxu0
  %1571 = vmatprep.subr.mxu0 0.0
  %1572 = vmatpush1.msra.mxu0 0.0
  %1573 = vmatprep.subr.mxu0 0.0
  %1574 = vmatpush1.msra.mxu0 0.0
  %1575 = vmatprep.subr.mxu0 0.0
  %1576 = vmatpush1.msra.mxu0 0.0
  %1577 = vmatprep.subr.mxu0 0.0
  %1578 = vmatpush1.msra.mxu0 0.0
  %1579 = vmatprep.subr.mxu0 0.0
  %1580 = vmatpush1.msra.mxu0 0.0
  %1581 = vmatprep.subr.mxu0 0.0
  %1582 = vmatpush1.msra.mxu0 0.0
  %1583 = vmatprep.subr.mxu0 0.0
  %1584 = vmatpush1.msra.mxu0 0.0
  %1585 = vmatprep.subr.mxu0 0.0
  %1586 = vmatpush1.msra.mxu0 0.0
  %1587 = vmatprep.subr.mxu0 0.0
  %1588 = vmatpush1.msra.mxu0 0.0
  %1589 = vmatprep.subr.mxu0 0.0
  %1590 = vmatpush1.msra.mxu0 0.0
  %1591 = vmatprep.subr.mxu0 0.0
  %1592 = vmatpush1.msra.mxu0 0.0
  %1593 = vmatprep.subr.mxu0 0.0
  %1594 = vmatpush1.msra.mxu0 0.0
  %1595 = vmatprep.subr.mxu0 0.0
  %1596 = vmatpush1.msra.mxu0 %v28
  %1597 = vmatprep.subr.mxu0 0.0
  %1598 = vmatpush1.msra.mxu0 %v27
  %1599 = vmatprep.subr.mxu0 0.0
  %1600 = vmatpush1.msra.mxu0 %v26
  %1601 = vmatprep.subr.mxu0 0.0
  %1602 = vmatpush1.msra.mxu0 %v25
  %1603 = vmatprep.subr.mxu0 0.0
  %1604 = vmatpush2.msra.mxu0 0.0
  %1605 = vmatprep.subr.mxu0 0.0
  %1606 = vmatpush2.msra.mxu0 0.0
  %1607 = vmatprep.subr.mxu0 0.0
  %1608 = vmatpush2.msra.mxu0 0.0
  %1609 = vmatprep.subr.mxu0 0.0
  %1610 = vmatpush2.msra.mxu0 0.0
  %1611 = vmatprep.subr.mxu0 0.0
  %1612 = vmatpush2.msra.mxu0 0.0
  %1613 = vmatprep.subr.mxu0 0.0
  %1614 = vmatpush2.msra.mxu0 0.0
  %1615 = vmatprep.subr.mxu0 0.0
  %1616 = vmatpush2.msra.mxu0 0.0
  %1617 = vmatprep.subr.mxu0 0.0
  %1618 = vmatpush2.msra.mxu0 0.0
  %1619 = vmatprep.subr.mxu0 0.0
  %1620 = vmatpush2.msra.mxu0 0.0
  %1621 = vmatprep.subr.mxu0 0.0
  %1622 = vmatpush2.msra.mxu0 0.0
  %1623 = vmatprep.subr.mxu0 0.0
  %1624 = vmatpush2.msra.mxu0 0.0
  %1625 = vmatprep.subr.mxu0 0.0
  %1626 = vmatpush2.msra.mxu0 0.0
  %1627 = vmatprep.subr.mxu0 0.0
  %1628 = vmatpush2.msra.mxu0 0.0
  %1629 = vmatprep.subr.mxu0 0.0
  %1630 = vmatpush2.msra.mxu0 0.0
  %1631 = vmatprep.subr.mxu0 0.0
  %1632 = vmatpush2.msra.mxu0 0.0
  %1633 = vmatprep.subr.mxu0 0.0
  %1634 = vmatpush2.msra.mxu0 0.0
  %1635 = vmatprep.mubr.f32.mxu0 0.0
  %1636 = vmatmul.mubr.f32.gmra.mxu0 %v1499
  %v1637 = vpop.f32.mrf.mxu0
  %v1638 = vadd.f32 0.0, %v1637
  %v1639 = vpop.f32.mrf.mxu0
  %1640 = vdwg.mxu0
  %1641 = vmatprep.subr.mxu0 0.0
  %1642 = vmatpush1.msra.mxu0 0.0
  %1643 = vmatprep.subr.mxu0 0.0
  %1644 = vmatpush1.msra.mxu0 0.0
  %1645 = vmatprep.subr.mxu0 0.0
  %1646 = vmatpush1.msra.mxu0 0.0
  %1647 = vmatprep.subr.mxu0 0.0
  %1648 = vmatpush1.msra.mxu0 0.0
  %1649 = vmatprep.subr.mxu0 0.0
  %1650 = vmatpush1.msra.mxu0 0.0
  %1651 = vmatprep.subr.mxu0 0.0
  %1652 = vmatpush1.msra.mxu0 0.0
  %1653 = vmatprep.subr.mxu0 0.0
  %1654 = vmatpush1.msra.mxu0 0.0
  %1655 = vmatprep.subr.mxu0 0.0
  %1656 = vmatpush1.msra.mxu0 0.0
  %1657 = vmatprep.subr.mxu0 0.0
  %1658 = vmatpush1.msra.mxu0 0.0
  %1659 = vmatprep.subr.mxu0 0.0
  %1660 = vmatpush1.msra.mxu0 0.0
  %1661 = vmatprep.subr.mxu0 0.0
  %1662 = vmatpush1.msra.mxu0 0.0
  %1663 = vmatprep.subr.mxu0 0.0
  %1664 = vmatpush1.msra.mxu0 0.0
  %1665 = vmatprep.subr.mxu0 0.0
  %1666 = vmatpush1.msra.mxu0 %v33
  %1667 = vmatprep.subr.mxu0 0.0
  %1668 = vmatpush1.msra.mxu0 %v32
  %1669 = vmatprep.subr.mxu0 0.0
  %1670 = vmatpush1.msra.mxu0 %v31
  %1671 = vmatprep.subr.mxu0 0.0
  %1672 = vmatpush1.msra.mxu0 %v30
  %1673 = vmatprep.subr.mxu0 0.0
  %1674 = vmatpush2.msra.mxu0 0.0
  %1675 = vmatprep.subr.mxu0 0.0
  %1676 = vmatpush2.msra.mxu0 0.0
  %1677 = vmatprep.subr.mxu0 0.0
  %1678 = vmatpush2.msra.mxu0 0.0
  %1679 = vmatprep.subr.mxu0 0.0
  %1680 = vmatpush2.msra.mxu0 0.0
  %1681 = vmatprep.subr.mxu0 0.0
  %1682 = vmatpush2.msra.mxu0 0.0
  %1683 = vmatprep.subr.mxu0 0.0
  %1684 = vmatpush2.msra.mxu0 0.0
  %1685 = vmatprep.subr.mxu0 0.0
  %1686 = vmatpush2.msra.mxu0 0.0
  %1687 = vmatprep.subr.mxu0 0.0
  %1688 = vmatpush2.msra.mxu0 0.0
  %1689 = vmatprep.subr.mxu0 0.0
  %1690 = vmatpush2.msra.mxu0 0.0
  %1691 = vmatprep.subr.mxu0 0.0
  %1692 = vmatpush2.msra.mxu0 0.0
  %1693 = vmatprep.subr.mxu0 0.0
  %1694 = vmatpush2.msra.mxu0 0.0
  %1695 = vmatprep.subr.mxu0 0.0
  %1696 = vmatpush2.msra.mxu0 0.0
  %1697 = vmatprep.subr.mxu0 0.0
  %1698 = vmatpush2.msra.mxu0 0.0
  %1699 = vmatprep.subr.mxu0 0.0
  %1700 = vmatpush2.msra.mxu0 0.0
  %1701 = vmatprep.subr.mxu0 0.0
  %1702 = vmatpush2.msra.mxu0 0.0
  %1703 = vmatprep.subr.mxu0 0.0
  %1704 = vmatpush2.msra.mxu0 0.0
  %1705 = vmatprep.mubr.f32.mxu0 0.0
  %1706 = vmatmul.mubr.f32.gmra.mxu0 %v1499
  %v1707 = vpop.f32.mrf.mxu0
  %v1708 = vadd.f32 %v187, %v1707
  %v1709 = vpop.f32.mrf.mxu0
  %1710 = vdwg.mxu0
  %v1711 = vadd.f32 %v1494, %v1568
  %v1712 = vxor.u32 %v1711, 2147483648
  %v1713 = vmul.f32 %v1712, 1.442695
  %v1714 = vpow.pop %v1713
  %v1715 = vadd.f32 %v1714, 1.0
  %v1716 = vrcp.pop %v1715
  %v1717 = vmul.f32 1.0, %v1716
  %v1718 = vadd.f32 %v1495, %v1638
  %v1719 = vxor.u32 %v1718, 2147483648
  %v1720 = vmul.f32 %v1719, 1.442695
  %v1721 = vpow.pop %v1720
  %v1722 = vadd.f32 %v1721, 1.0
  %v1723 = vrcp.pop %v1722
  %v1724 = vmul.f32 1.0, %v1723
  %v1725 = vmul.f32 %v1717, %v1708
  %v1726 = vadd.f32 %v1496, %v1725
  %v1727 = vtanh.pop %v1726
  %v1728 = vsub.f32 1.0, %v1724
  %v1729 = vmul.f32 %v1728, %v1727
  %v1730 = vmul.f32 %v1724, %v1497
  %v1731 = vadd.f32 %v1729, %v1730
  %1732 = vst.msk [vmem:[#allocation2] sm:$0x3] %vm280, %v1731
  %s1733 = scalar_lea.vmem %s3, 12
  %1734 = vst.msk [vmem:[%s1733] sm:$0x3] %vm280, %v1731
  %s1735 = scalar_lea.vmem %s0, 42
  %v1736 = vld [vmem:[%s1735] sm:$0x3]
  %v1737 = vld [vmem:[%s1735 + $0x2] sm:$0x3]
  %v1738 = vld [vmem:[%s1735 + $0x4] sm:$0x3]
  %v1739 = vld [vmem:[#allocation2] sm:$0x3]
  %v1741 = vsel %vm39, %v1739, 0
  %1743 = vmatprep.subr.mxu0 0.0
  %1744 = vmatpush1.msra.mxu0 0.0
  %1745 = vmatprep.subr.mxu0 0.0
  %1746 = vmatpush1.msra.mxu0 0.0
  %1747 = vmatprep.subr.mxu0 0.0
  %1748 = vmatpush1.msra.mxu0 0.0
  %1749 = vmatprep.subr.mxu0 0.0
  %1750 = vmatpush1.msra.mxu0 0.0
  %1751 = vmatprep.subr.mxu0 0.0
  %1752 = vmatpush1.msra.mxu0 0.0
  %1753 = vmatprep.subr.mxu0 0.0
  %1754 = vmatpush1.msra.mxu0 0.0
  %1755 = vmatprep.subr.mxu0 0.0
  %1756 = vmatpush1.msra.mxu0 0.0
  %1757 = vmatprep.subr.mxu0 0.0
  %1758 = vmatpush1.msra.mxu0 0.0
  %1759 = vmatprep.subr.mxu0 0.0
  %1760 = vmatpush1.msra.mxu0 0.0
  %1761 = vmatprep.subr.mxu0 0.0
  %1762 = vmatpush1.msra.mxu0 0.0
  %1763 = vmatprep.subr.mxu0 0.0
  %1764 = vmatpush1.msra.mxu0 0.0
  %1765 = vmatprep.subr.mxu0 0.0
  %1766 = vmatpush1.msra.mxu0 0.0
  %1767 = vmatprep.subr.mxu0 0.0
  %1768 = vmatpush1.msra.mxu0 %v23
  %1769 = vmatprep.subr.mxu0 0.0
  %1770 = vmatpush1.msra.mxu0 %v22
  %1771 = vmatprep.subr.mxu0 0.0
  %1772 = vmatpush1.msra.mxu0 %v21
  %1773 = vmatprep.subr.mxu0 0.0
  %1774 = vmatpush1.msra.mxu0 %v20
  %1775 = vmatprep.subr.mxu0 0.0
  %1776 = vmatpush2.msra.mxu0 0.0
  %1777 = vmatprep.subr.mxu0 0.0
  %1778 = vmatpush2.msra.mxu0 0.0
  %1779 = vmatprep.subr.mxu0 0.0
  %1780 = vmatpush2.msra.mxu0 0.0
  %1781 = vmatprep.subr.mxu0 0.0
  %1782 = vmatpush2.msra.mxu0 0.0
  %1783 = vmatprep.subr.mxu0 0.0
  %1784 = vmatpush2.msra.mxu0 0.0
  %1785 = vmatprep.subr.mxu0 0.0
  %1786 = vmatpush2.msra.mxu0 0.0
  %1787 = vmatprep.subr.mxu0 0.0
  %1788 = vmatpush2.msra.mxu0 0.0
  %1789 = vmatprep.subr.mxu0 0.0
  %1790 = vmatpush2.msra.mxu0 0.0
  %1791 = vmatprep.subr.mxu0 0.0
  %1792 = vmatpush2.msra.mxu0 0.0
  %1793 = vmatprep.subr.mxu0 0.0
  %1794 = vmatpush2.msra.mxu0 0.0
  %1795 = vmatprep.subr.mxu0 0.0
  %1796 = vmatpush2.msra.mxu0 0.0
  %1797 = vmatprep.subr.mxu0 0.0
  %1798 = vmatpush2.msra.mxu0 0.0
  %1799 = vmatprep.subr.mxu0 0.0
  %1800 = vmatpush2.msra.mxu0 0.0
  %1801 = vmatprep.subr.mxu0 0.0
  %1802 = vmatpush2.msra.mxu0 0.0
  %1803 = vmatprep.subr.mxu0 0.0
  %1804 = vmatpush2.msra.mxu0 0.0
  %1805 = vmatprep.subr.mxu0 0.0
  %1806 = vmatpush2.msra.mxu0 0.0
  %1807 = vmatprep.mubr.f32.mxu0 0.0
  %1808 = vmatmul.mubr.f32.gmra.mxu0 %v1741
  %v1809 = vpop.f32.mrf.mxu0
  %v1810 = vadd.f32 0.0, %v1809
  %v1811 = vpop.f32.mrf.mxu0
  %1812 = vdwg.mxu0
  %1813 = vmatprep.subr.mxu0 0.0
  %1814 = vmatpush1.msra.mxu0 0.0
  %1815 = vmatprep.subr.mxu0 0.0
  %1816 = vmatpush1.msra.mxu0 0.0
  %1817 = vmatprep.subr.mxu0 0.0
  %1818 = vmatpush1.msra.mxu0 0.0
  %1819 = vmatprep.subr.mxu0 0.0
  %1820 = vmatpush1.msra.mxu0 0.0
  %1821 = vmatprep.subr.mxu0 0.0
  %1822 = vmatpush1.msra.mxu0 0.0
  %1823 = vmatprep.subr.mxu0 0.0
  %1824 = vmatpush1.msra.mxu0 0.0
  %1825 = vmatprep.subr.mxu0 0.0
  %1826 = vmatpush1.msra.mxu0 0.0
  %1827 = vmatprep.subr.mxu0 0.0
  %1828 = vmatpush1.msra.mxu0 0.0
  %1829 = vmatprep.subr.mxu0 0.0
  %1830 = vmatpush1.msra.mxu0 0.0
  %1831 = vmatprep.subr.mxu0 0.0
  %1832 = vmatpush1.msra.mxu0 0.0
  %1833 = vmatprep.subr.mxu0 0.0
  %1834 = vmatpush1.msra.mxu0 0.0
  %1835 = vmatprep.subr.mxu0 0.0
  %1836 = vmatpush1.msra.mxu0 0.0
  %1837 = vmatprep.subr.mxu0 0.0
  %1838 = vmatpush1.msra.mxu0 %v28
  %1839 = vmatprep.subr.mxu0 0.0
  %1840 = vmatpush1.msra.mxu0 %v27
  %1841 = vmatprep.subr.mxu0 0.0
  %1842 = vmatpush1.msra.mxu0 %v26
  %1843 = vmatprep.subr.mxu0 0.0
  %1844 = vmatpush1.msra.mxu0 %v25
  %1845 = vmatprep.subr.mxu0 0.0
  %1846 = vmatpush2.msra.mxu0 0.0
  %1847 = vmatprep.subr.mxu0 0.0
  %1848 = vmatpush2.msra.mxu0 0.0
  %1849 = vmatprep.subr.mxu0 0.0
  %1850 = vmatpush2.msra.mxu0 0.0
  %1851 = vmatprep.subr.mxu0 0.0
  %1852 = vmatpush2.msra.mxu0 0.0
  %1853 = vmatprep.subr.mxu0 0.0
  %1854 = vmatpush2.msra.mxu0 0.0
  %1855 = vmatprep.subr.mxu0 0.0
  %1856 = vmatpush2.msra.mxu0 0.0
  %1857 = vmatprep.subr.mxu0 0.0
  %1858 = vmatpush2.msra.mxu0 0.0
  %1859 = vmatprep.subr.mxu0 0.0
  %1860 = vmatpush2.msra.mxu0 0.0
  %1861 = vmatprep.subr.mxu0 0.0
  %1862 = vmatpush2.msra.mxu0 0.0
  %1863 = vmatprep.subr.mxu0 0.0
  %1864 = vmatpush2.msra.mxu0 0.0
  %1865 = vmatprep.subr.mxu0 0.0
  %1866 = vmatpush2.msra.mxu0 0.0
  %1867 = vmatprep.subr.mxu0 0.0
  %1868 = vmatpush2.msra.mxu0 0.0
  %1869 = vmatprep.subr.mxu0 0.0
  %1870 = vmatpush2.msra.mxu0 0.0
  %1871 = vmatprep.subr.mxu0 0.0
  %1872 = vmatpush2.msra.mxu0 0.0
  %1873 = vmatprep.subr.mxu0 0.0
  %1874 = vmatpush2.msra.mxu0 0.0
  %1875 = vmatprep.subr.mxu0 0.0
  %1876 = vmatpush2.msra.mxu0 0.0
  %1877 = vmatprep.mubr.f32.mxu0 0.0
  %1878 = vmatmul.mubr.f32.gmra.mxu0 %v1741
  %v1879 = vpop.f32.mrf.mxu0
  %v1880 = vadd.f32 0.0, %v1879
  %v1881 = vpop.f32.mrf.mxu0
  %1882 = vdwg.mxu0
  %1883 = vmatprep.subr.mxu0 0.0
  %1884 = vmatpush1.msra.mxu0 0.0
  %1885 = vmatprep.subr.mxu0 0.0
  %1886 = vmatpush1.msra.mxu0 0.0
  %1887 = vmatprep.subr.mxu0 0.0
  %1888 = vmatpush1.msra.mxu0 0.0
  %1889 = vmatprep.subr.mxu0 0.0
  %1890 = vmatpush1.msra.mxu0 0.0
  %1891 = vmatprep.subr.mxu0 0.0
  %1892 = vmatpush1.msra.mxu0 0.0
  %1893 = vmatprep.subr.mxu0 0.0
  %1894 = vmatpush1.msra.mxu0 0.0
  %1895 = vmatprep.subr.mxu0 0.0
  %1896 = vmatpush1.msra.mxu0 0.0
  %1897 = vmatprep.subr.mxu0 0.0
  %1898 = vmatpush1.msra.mxu0 0.0
  %1899 = vmatprep.subr.mxu0 0.0
  %1900 = vmatpush1.msra.mxu0 0.0
  %1901 = vmatprep.subr.mxu0 0.0
  %1902 = vmatpush1.msra.mxu0 0.0
  %1903 = vmatprep.subr.mxu0 0.0
  %1904 = vmatpush1.msra.mxu0 0.0
  %1905 = vmatprep.subr.mxu0 0.0
  %1906 = vmatpush1.msra.mxu0 0.0
  %1907 = vmatprep.subr.mxu0 0.0
  %1908 = vmatpush1.msra.mxu0 %v33
  %1909 = vmatprep.subr.mxu0 0.0
  %1910 = vmatpush1.msra.mxu0 %v32
  %1911 = vmatprep.subr.mxu0 0.0
  %1912 = vmatpush1.msra.mxu0 %v31
  %1913 = vmatprep.subr.mxu0 0.0
  %1914 = vmatpush1.msra.mxu0 %v30
  %1915 = vmatprep.subr.mxu0 0.0
  %1916 = vmatpush2.msra.mxu0 0.0
  %1917 = vmatprep.subr.mxu0 0.0
  %1918 = vmatpush2.msra.mxu0 0.0
  %1919 = vmatprep.subr.mxu0 0.0
  %1920 = vmatpush2.msra.mxu0 0.0
  %1921 = vmatprep.subr.mxu0 0.0
  %1922 = vmatpush2.msra.mxu0 0.0
  %1923 = vmatprep.subr.mxu0 0.0
  %1924 = vmatpush2.msra.mxu0 0.0
  %1925 = vmatprep.subr.mxu0 0.0
  %1926 = vmatpush2.msra.mxu0 0.0
  %1927 = vmatprep.subr.mxu0 0.0
  %1928 = vmatpush2.msra.mxu0 0.0
  %1929 = vmatprep.subr.mxu0 0.0
  %1930 = vmatpush2.msra.mxu0 0.0
  %1931 = vmatprep.subr.mxu0 0.0
  %1932 = vmatpush2.msra.mxu0 0.0
  %1933 = vmatprep.subr.mxu0 0.0
  %1934 = vmatpush2.msra.mxu0 0.0
  %1935 = vmatprep.subr.mxu0 0.0
  %1936 = vmatpush2.msra.mxu0 0.0
  %1937 = vmatprep.subr.mxu0 0.0
  %1938 = vmatpush2.msra.mxu0 0.0
  %1939 = vmatprep.subr.mxu0 0.0
  %1940 = vmatpush2.msra.mxu0 0.0
  %1941 = vmatprep.subr.mxu0 0.0
  %1942 = vmatpush2.msra.mxu0 0.0
  %1943 = vmatprep.subr.mxu0 0.0
  %1944 = vmatpush2.msra.mxu0 0.0
  %1945 = vmatprep.subr.mxu0 0.0
  %1946 = vmatpush2.msra.mxu0 0.0
  %1947 = vmatprep.mubr.f32.mxu0 0.0
  %1948 = vmatmul.mubr.f32.gmra.mxu0 %v1741
  %v1949 = vpop.f32.mrf.mxu0
  %v1950 = vadd.f32 %v187, %v1949
  %v1951 = vpop.f32.mrf.mxu0
  %1952 = vdwg.mxu0
  %v1953 = vadd.f32 %v1736, %v1810
  %v1954 = vxor.u32 %v1953, 2147483648
  %v1955 = vmul.f32 %v1954, 1.442695
  %v1956 = vpow.pop %v1955
  %v1957 = vadd.f32 %v1956, 1.0
  %v1958 = vrcp.pop %v1957
  %v1959 = vmul.f32 1.0, %v1958
  %v1960 = vadd.f32 %v1737, %v1880
  %v1961 = vxor.u32 %v1960, 2147483648
  %v1962 = vmul.f32 %v1961, 1.442695
  %v1963 = vpow.pop %v1962
  %v1964 = vadd.f32 %v1963, 1.0
  %v1965 = vrcp.pop %v1964
  %v1966 = vmul.f32 1.0, %v1965
  %v1967 = vmul.f32 %v1959, %v1950
  %v1968 = vadd.f32 %v1738, %v1967
  %v1969 = vtanh.pop %v1968
  %v1970 = vsub.f32 1.0, %v1966
  %v1971 = vmul.f32 %v1970, %v1969
  %v1972 = vmul.f32 %v1966, %v1739
  %v1973 = vadd.f32 %v1971, %v1972
  %1974 = vst.msk [vmem:[#allocation2] sm:$0x3] %vm280, %v1973
  %s1975 = scalar_lea.vmem %s3, 14
  %1976 = vst.msk [vmem:[%s1975] sm:$0x3] %vm280, %v1973
  // Predicated region
  $region18: #{encoder_rnn_forward.2} parent=0 // pred_check
    _
  $region19: #{encoder_rnn_forward.2} parent=0 // pred_check_branch
    %1978 = sbr.rel (0) target = $region21
  $region20: #{encoder_rnn_forward.2} parent=0 // pred_region
    _
  $region21: #{encoder_rnn_forward.2} parent=0 // pred_fallthru
    _
  // Predicated region
  $region22: #{encoder_rnn_forward.2} parent=0 // pred_check
    _
  $region23: #{encoder_rnn_forward.2} parent=0 // pred_check_branch
    %1980 = sbr.rel (0) target = $region25
  $region24: #{encoder_rnn_forward.2} parent=0 // pred_region
    _
  $region25: #{encoder_rnn_forward.2} parent=0 // pred_fallthru
    _

</llo_original>
